<compile_context>
chip_gen: v5e
topology: v5e:2x2
jax: 0.10.0
libtpu: 0.0.40
codegen_flags: <defaults>
</compile_context>

<pallas_src>
import math
import numpy as np
import jax
import jax.numpy as jnp
from jax.experimental import pallas as pl
from jax.experimental.pallas import tpu as pltpu

# ---- model hyper-parameters (small, consistent with the module) -------------
VOCAB = 50
HIDDEN = 32
INTERMEDIATE = 64
NUM_HEADS = 4
HEAD_DIM = HIDDEN // NUM_HEADS
NUM_LAYERS = 2
PAD_IDX = 0
MAX_LEN = 16
EPS = 1e-6

B = 2   # batch
S = 8   # sequence length
BS = B * S

# packed-operand geometry
EMB_ROWS = ((VOCAB + 7) // 8) * 8            # 56: embedding rows, sublane aligned
TBL_ROWS = EMB_ROWS + BS                     # 72: [emb ; per-(b,s) pos rows]
VEC_COLS = max(HIDDEN, INTERMEDIATE)         # 64
VEC_PER_LAYER = 7                            # bo, g1, b1, bf1, bf2, g2, b2
VEC_ROWS = 2 + VEC_PER_LAYER * NUM_LAYERS    # 16 (rows 0,1 = outer gamma/beta)


# ---- shared in-kernel helper -------------------------------------------------
def _layernorm(x, gamma, beta):
    # torch.nn.LayerNorm: biased variance over last dim, eps inside sqrt
    mean = jnp.mean(x, axis=-1, keepdims=True)
    var = jnp.mean((x - mean) ** 2, axis=-1, keepdims=True)
    return (x - mean) * jax.lax.rsqrt(var + EPS) * gamma + beta


# ---- the single fused kernel --------------------------------------------------
def fused_transformer_kernel(idc_ref, idr_ref, tbl_ref, wqkv_ref, wo_ref,
                             w1_ref, w2_ref, vec_ref, out_ref):
    ids_col = idc_ref[...]                                  # (BS, 1) int32
    ids_row = idr_ref[...]                                  # (1, BS) int32
    tbl = tbl_ref[...]                                      # (TBL_ROWS, H)
    vec = vec_ref[...]                                      # (VEC_ROWS, 64)

    # --- in-kernel embedding gather: one-hot x table on the MXU ------------
    # (padding row of the table is zero -> nn.Embedding(padding_idx) semantics)
    vocab_iota = jax.lax.broadcasted_iota(jnp.int32, (BS, EMB_ROWS), 1)
    onehot = (ids_col == vocab_iota).astype(jnp.float32)    # (BS, EMB_ROWS)
    tok = jnp.dot(onehot, tbl[:EMB_ROWS, :], preferred_element_type=jnp.float32)
    x = tok + tbl[EMB_ROWS:EMB_ROWS + BS, :]                # + positional encoding
    x = _layernorm(x, vec[0:1, :HIDDEN], vec[1:2, :HIDDEN])  # outer LayerNorm

    # --- in-kernel additive mask, built once and hoisted out of the loop ----
    # Attention runs over all B*S keys with heads as the batch dim; pairs that
    # cross the batch boundary or hit a padded key get -1e9 (=> exp underflows
    # to exact 0), which reproduces per-batch masked attention exactly.
    iq = jax.lax.broadcasted_iota(jnp.int32, (BS, BS), 0).astype(jnp.float32)
    ik = jax.lax.broadcasted_iota(jnp.int32, (BS, BS), 1).astype(jnp.float32)
    same_batch = jnp.floor(iq * (1.0 / S)) == jnp.floor(ik * (1.0 / S))
    mask_add = (jnp.where(same_batch, jnp.float32(0.0), jnp.float32(-1.0e9))
                + jnp.where(ids_row != PAD_IDX, jnp.float32(0.0), jnp.float32(-1.0e9)))
    mask_full = jnp.broadcast_to(mask_add[None, :, :], (NUM_HEADS, BS, BS))

    # --- encoder stack: static loop, activations stay resident in VMEM ------
    for l in range(NUM_LAYERS):
        base = 2 + VEC_PER_LAYER * l
        bo = vec[base + 0:base + 1, :HIDDEN]
        g1 = vec[base + 1:base + 2, :HIDDEN]
        b1 = vec[base + 2:base + 3, :HIDDEN]
        bf1 = vec[base + 3:base + 4, :INTERMEDIATE]
        bf2 = vec[base + 4:base + 5, :HIDDEN]
        g2 = vec[base + 5:base + 6, :HIDDEN]
        b2 = vec[base + 6:base + 7, :HIDDEN]

        # fused QKV projection; weight columns are grouped per head
        # ([q|k|v] x HEAD_DIM each) and 1/sqrt(head_dim) is folded into Q.
        qkv = jnp.dot(x, wqkv_ref[l], preferred_element_type=jnp.float32)   # (BS, 3H)

        # head split: one 24-wide lane slice + leading-axis concat per head
        blk = jnp.concatenate(
            [qkv[:, h * 3 * HEAD_DIM:(h + 1) * 3 * HEAD_DIM]
                 .reshape(1, BS, 3 * HEAD_DIM)
             for h in range(NUM_HEADS)], axis=0)                            # (NH, BS, 24)
        qh = blk[:, :, 0:HEAD_DIM]
        kh = blk[:, :, HEAD_DIM:2 * HEAD_DIM]
        vh = blk[:, :, 2 * HEAD_DIM:3 * HEAD_DIM]

        # batched attention over all heads at once
        s = jnp.einsum('nqd,nkd->nqk', qh, kh,
                       preferred_element_type=jnp.float32)                  # (NH, BS, BS)
        s = s + mask_full
        s = s - jnp.max(s, axis=-1, keepdims=True)
        p = jnp.exp(s)
        denom = jnp.sum(p, axis=-1, keepdims=True)
        inv = pl.reciprocal(denom, approx=True)         # EUP slot (free-ish)
        inv = inv * (2.0 - denom * inv)                 # one Newton step -> f32 accuracy
        p = p * inv
        ctx = jnp.einsum('nqk,nkd->nqd', p, vh,
                         preferred_element_type=jnp.float32)                # (NH, BS, HD)

        # head merge: single lane concat in head order
        ctx2 = jnp.concatenate([ctx[h] for h in range(NUM_HEADS)], axis=-1)  # (BS, H)

        attn = jnp.dot(ctx2, wo_ref[l], preferred_element_type=jnp.float32) + bo
        attn = attn + x                                  # residual (dropout = identity)
        attn = _layernorm(attn, g1, b1)

        hid = jnp.dot(attn, w1_ref[l], preferred_element_type=jnp.float32) + bf1
        hid = jnp.maximum(hid, 0.0)                      # ReLU
        hid = jnp.dot(hid, w2_ref[l], preferred_element_type=jnp.float32) + bf2
        hid = hid + attn                                 # residual (dropout = identity)
        x = _layernorm(hid, g2, b2)

    out_ref[...] = x


# ---- pallas_call wrapper (single launch, no grid: everything fits VMEM) ------
@jax.jit
def transformer_encoder(input_ids, tbl, wqkv, wo, w1, w2, vecs):
    # (B,S) -> (BS,1) / (1,BS): pure layout reshapes, no dispatched glue ops.
    ids_col = input_ids.reshape(BS, 1)
    ids_row = input_ids.reshape(1, BS)
    out = pl.pallas_call(
        fused_transformer_kernel,
        out_shape=jax.ShapeDtypeStruct((BS, HIDDEN), jnp.float32),
        in_specs=[pl.BlockSpec(memory_space=pltpu.MemorySpace.VMEM)
                  for _ in range(8)],
        out_specs=pl.BlockSpec(memory_space=pltpu.MemorySpace.VMEM),
    )(ids_col, ids_row, tbl, wqkv, wo, w1, w2, vecs)
    return out.reshape(B, S, HIDDEN)


# ---- parameter / buffer construction ----------------------------------------
def make_pos_encoding(embed_dim, max_len):
    tbl = np.array([[pos / np.power(10000, 2 * (i // 2) / embed_dim)
                     for i in range(embed_dim)] for pos in range(max_len)])
    tbl[:, 0::2] = np.sin(tbl[:, 0::2])
    tbl[:, 1::2] = np.cos(tbl[:, 1::2])
    return jnp.asarray(tbl, dtype=jnp.float32)[None]          # (1, max_len, H)


def init_params(key):
    def linear(k, fan_in, fan_out):
        bound = 1.0 / math.sqrt(fan_in)
        return jax.random.uniform(k, (fan_in, fan_out), jnp.float32, -bound, bound)

    keys = iter(jax.random.split(key, 64))
    emb = jax.random.normal(next(keys), (VOCAB, HIDDEN), jnp.float32)
    emb = emb.at[PAD_IDX].set(0.0)                            # padding_idx row

    outer_gamma = jnp.ones((1, HIDDEN), jnp.float32)
    outer_beta = jnp.zeros((1, HIDDEN), jnp.float32)

    layers = []
    for _ in range(NUM_LAYERS):
        bound_h = 1.0 / math.sqrt(HIDDEN)
        bound_i = 1.0 / math.sqrt(INTERMEDIATE)
        layers.append({
            "wq": linear(next(keys), HIDDEN, HIDDEN),
            "wk": linear(next(keys), HIDDEN, HIDDEN),
            "wv": linear(next(keys), HIDDEN, HIDDEN),
            "wo": linear(next(keys), HIDDEN, HIDDEN),
            "bo": jax.random.uniform(next(keys), (1, HIDDEN), jnp.float32, -bound_h, bound_h),
            "g1": jnp.ones((1, HIDDEN), jnp.float32),
            "b1": jnp.zeros((1, HIDDEN), jnp.float32),
            "w1": linear(next(keys), HIDDEN, INTERMEDIATE),
            "bf1": jax.random.uniform(next(keys), (1, INTERMEDIATE), jnp.float32, -bound_h, bound_h),
            "w2": linear(next(keys), INTERMEDIATE, HIDDEN),
            "bf2": jax.random.uniform(next(keys), (1, HIDDEN), jnp.float32, -bound_i, bound_i),
            "g2": jnp.ones((1, HIDDEN), jnp.float32),
            "b2": jnp.zeros((1, HIDDEN), jnp.float32),
        })
    return emb, outer_gamma, outer_beta, layers


def pack_params(emb, outer_gamma, outer_beta, layers, pos_table):
    """Pack everything into 6 tensor operands:
       tbl  (TBL_ROWS, H): padded embedding rows + per-(b,s) positional rows
       wqkv (L, H, 3H)   : head-grouped fused QKV, scale folded into Q cols
       wo/w1/w2          : stacked per-layer weights
       vecs (VEC_ROWS,64): all bias / LayerNorm vectors."""
    scale = 1.0 / math.sqrt(HEAD_DIM)

    pos_bsh = jnp.tile(pos_table[0, :S, :], (B, 1))           # (BS, H)
    tbl = jnp.zeros((TBL_ROWS, HIDDEN), jnp.float32)
    tbl = tbl.at[:VOCAB].set(emb)
    tbl = tbl.at[EMB_ROWS:EMB_ROWS + BS].set(pos_bsh)

    def qkv_grouped(p):
        cols = []
        for h in range(NUM_HEADS):
            sl = slice(h * HEAD_DIM, (h + 1) * HEAD_DIM)
            cols += [p["wq"][:, sl] * scale, p["wk"][:, sl], p["wv"][:, sl]]
        return jnp.concatenate(cols, axis=1)                  # (H, 3H)

    wqkv = jnp.stack([qkv_grouped(p) for p in layers], axis=0)
    wo = jnp.stack([p["wo"] for p in layers], axis=0)
    w1 = jnp.stack([p["w1"] for p in layers], axis=0)
    w2 = jnp.stack([p["w2"] for p in layers], axis=0)

    vecs = np.zeros((VEC_ROWS, VEC_COLS), np.float32)

    def put(row, v):
        v = np.asarray(v).reshape(-1)
        vecs[row, :v.shape[0]] = v

    put(0, outer_gamma)
    put(1, outer_beta)
    for l, p in enumerate(layers):
        base = 2 + VEC_PER_LAYER * l
        put(base + 0, p["bo"])
        put(base + 1, p["g1"])
        put(base + 2, p["b1"])
        put(base + 3, p["bf1"])
        put(base + 4, p["bf2"])
        put(base + 5, p["g2"])
        put(base + 6, p["b2"])

    return tbl, wqkv, wo, w1, w2, jnp.asarray(vecs)


# ---- pure-JAX reference (same math as the PyTorch module) --------------------
def reference(input_ids, emb, outer_gamma, outer_beta, layers, pos_table):
    def ln(x, g, b):
        m = jnp.mean(x, -1, keepdims=True)
        v = jnp.mean((x - m) ** 2, -1, keepdims=True)
        return (x - m) / jnp.sqrt(v + EPS) * g + b

    mask = (input_ids != PAD_IDX).astype(jnp.float32)[:, None, :]    # (B,1,S)
    x = jnp.take(emb, input_ids, axis=0) + pos_table[:, :S, :]
    x = ln(x, outer_gamma, outer_beta)
    for p in layers:
        q = (x @ p["wq"]).reshape(B, S, NUM_HEADS, HEAD_DIM).transpose(0, 2, 1, 3)
        k = (x @ p["wk"]).reshape(B, S, NUM_HEADS, HEAD_DIM).transpose(0, 2, 1, 3)
        v = (x @ p["wv"]).reshape(B, S, NUM_HEADS, HEAD_DIM).transpose(0, 2, 1, 3)
        s = jnp.einsum("bhqd,bhkd->bhqk", q, k) / math.sqrt(HEAD_DIM)
        s = jnp.where(mask[:, None] == 0.0, -1.0e9, s)
        pr = jax.nn.softmax(s, axis=-1)
        ctx = jnp.einsum("bhqk,bhkd->bhqd", pr, v).transpose(0, 2, 1, 3).reshape(B, S, HIDDEN)
        a = ln(ctx @ p["wo"] + p["bo"] + x, p["g1"], p["b1"])
        h = jnp.maximum(a @ p["w1"] + p["bf1"], 0.0) @ p["w2"] + p["bf2"]
        x = ln(h + a, p["g2"], p["b2"])
    return x


if __name__ == "__main__":
    key = jax.random.PRNGKey(0)
    k_ids, k_params = jax.random.split(key)

    input_ids = jax.random.randint(k_ids, (B, S), 1, VOCAB, dtype=jnp.int32)
    # add some padding tokens to exercise the attention mask
    input_ids = input_ids.at[1, -2:].set(PAD_IDX)

    emb, og, ob, layers = init_params(k_params)
    pos_table = make_pos_encoding(HIDDEN, MAX_LEN)
    tbl, wqkv, wo, w1, w2, vecs = pack_params(emb, og, ob, layers, pos_table)

    out = transformer_encoder(input_ids, tbl, wqkv, wo, w1, w2, vecs)
    out = jax.block_until_ready(out)

    ref = reference(input_ids, emb, og, ob, layers, pos_table)
    np.testing.assert_allclose(np.asarray(out), np.asarray(ref), atol=1e-3, rtol=1e-3)

    print("KERNEL_OK")
</pallas_src>

<mosaic_0001>
module attributes {stable_mosaic.version = 11 : i64} {
  func.func @fused_transformer_kernel(%arg0: memref<16x1xi32, #tpu.memory_space<vmem>>, %arg1: memref<1x16xi32, #tpu.memory_space<vmem>>, %arg2: memref<72x32xf32, #tpu.memory_space<vmem>>, %arg3: memref<2x32x96xf32, #tpu.memory_space<vmem>>, %arg4: memref<2x32x32xf32, #tpu.memory_space<vmem>>, %arg5: memref<2x32x64xf32, #tpu.memory_space<vmem>>, %arg6: memref<2x64x32xf32, #tpu.memory_space<vmem>>, %arg7: memref<16x64xf32, #tpu.memory_space<vmem>>, %arg8: memref<16x32xf32, #tpu.memory_space<vmem>>) attributes {dimension_semantics = [], scalar_prefetch = 0 : i64, scratch_operands = 0 : i64, tpu.core_type = #tpu.core_type<tc>} {
    %c0 = arith.constant 0 : index
    %c0_0 = arith.constant 0 : index
    %0 = vector.load %arg0[%c0, %c0_0] : memref<16x1xi32, #tpu.memory_space<vmem>>, vector<16x1xi32>
    %c0_1 = arith.constant 0 : index
    %c0_2 = arith.constant 0 : index
    %1 = vector.load %arg1[%c0_1, %c0_2] : memref<1x16xi32, #tpu.memory_space<vmem>>, vector<1x16xi32>
    %c0_3 = arith.constant 0 : index
    %c0_4 = arith.constant 0 : index
    %2 = vector.load %arg2[%c0_3, %c0_4] : memref<72x32xf32, #tpu.memory_space<vmem>>, vector<72x32xf32>
    %c0_5 = arith.constant 0 : index
    %c0_6 = arith.constant 0 : index
    %3 = vector.load %arg7[%c0_5, %c0_6] : memref<16x64xf32, #tpu.memory_space<vmem>>, vector<16x64xf32>
    %4 = tpu.iota {dimensions = array<i32: 1>} : vector<16x56xi32>
    %5 = vector.broadcast %0 : vector<16x1xi32> to vector<16x56xi32>
    %6 = arith.cmpi eq, %5, %4 : vector<16x56xi32>
    %7 = arith.extui %6 : vector<16x56xi1> to vector<16x56xi32>
    %8 = arith.sitofp %7 : vector<16x56xi32> to vector<16x56xf32>
    %9 = vector.extract_strided_slice %2 {offsets = [0, 0], sizes = [56, 32], strides = [1, 1]} : vector<72x32xf32> to vector<56x32xf32>
    %cst = arith.constant dense<0.000000e+00> : vector<16x32xf32>
    %10 = tpu.matmul %8, %9, %cst {dimension_numbers = #tpu.dot_dimension_numbers<[1], [0], [0], [1], [0, 0, 1, 1], [], []>} : vector<16x56xf32>, vector<56x32xf32>, vector<16x32xf32> -> vector<16x32xf32>
    %11 = vector.extract_strided_slice %2 {offsets = [56, 0], sizes = [16, 32], strides = [1, 1]} : vector<72x32xf32> to vector<16x32xf32>
    %12 = arith.addf %10, %11 : vector<16x32xf32>
    %13 = vector.extract_strided_slice %3 {offsets = [0, 0], sizes = [1, 32], strides = [1, 1]} : vector<16x64xf32> to vector<1x32xf32>
    %14 = vector.extract_strided_slice %3 {offsets = [1, 0], sizes = [1, 32], strides = [1, 1]} : vector<16x64xf32> to vector<1x32xf32>
    %cst_7 = arith.constant dense<0.000000e+00> : vector<16xf32>
    %15 = vector.multi_reduction <add>, %12, %cst_7 [1] : vector<16x32xf32> to vector<16xf32>
    %16 = vector.shape_cast %15 : vector<16xf32> to vector<16x1xf32>
    %cst_8 = arith.constant 3.200000e+01 : f32
    %17 = vector.broadcast %cst_8 : f32 to vector<16x1xf32>
    %18 = arith.divf %16, %17 : vector<16x1xf32>
    %19 = vector.broadcast %18 : vector<16x1xf32> to vector<16x32xf32>
    %20 = arith.subf %12, %19 : vector<16x32xf32>
    %21 = arith.mulf %20, %20 : vector<16x32xf32>
    %cst_9 = arith.constant dense<0.000000e+00> : vector<16xf32>
    %22 = vector.multi_reduction <add>, %21, %cst_9 [1] : vector<16x32xf32> to vector<16xf32>
    %23 = vector.shape_cast %22 : vector<16xf32> to vector<16x1xf32>
    %cst_10 = arith.constant 3.200000e+01 : f32
    %24 = vector.broadcast %cst_10 : f32 to vector<16x1xf32>
    %25 = arith.divf %23, %24 : vector<16x1xf32>
    %26 = vector.broadcast %18 : vector<16x1xf32> to vector<16x32xf32>
    %27 = arith.subf %12, %26 : vector<16x32xf32>
    %cst_11 = arith.constant 9.99999997E-7 : f32
    %28 = vector.broadcast %cst_11 : f32 to vector<16x1xf32>
    %29 = arith.addf %25, %28 : vector<16x1xf32>
    %30 = math.rsqrt %29 : vector<16x1xf32>
    %31 = vector.broadcast %30 : vector<16x1xf32> to vector<16x32xf32>
    %32 = arith.mulf %27, %31 : vector<16x32xf32>
    %33 = vector.broadcast %13 : vector<1x32xf32> to vector<16x32xf32>
    %34 = arith.mulf %32, %33 : vector<16x32xf32>
    %35 = vector.broadcast %14 : vector<1x32xf32> to vector<16x32xf32>
    %36 = arith.addf %34, %35 : vector<16x32xf32>
    %37 = tpu.iota {dimensions = array<i32: 0>} : vector<16x16xi32>
    %38 = arith.sitofp %37 : vector<16x16xi32> to vector<16x16xf32>
    %39 = tpu.iota {dimensions = array<i32: 1>} : vector<16x16xi32>
    %40 = arith.sitofp %39 : vector<16x16xi32> to vector<16x16xf32>
    %cst_12 = arith.constant 1.250000e-01 : f32
    %41 = vector.broadcast %cst_12 : f32 to vector<16x16xf32>
    %42 = arith.mulf %38, %41 : vector<16x16xf32>
    %43 = math.floor %42 : vector<16x16xf32>
    %cst_13 = arith.constant 1.250000e-01 : f32
    %44 = vector.broadcast %cst_13 : f32 to vector<16x16xf32>
    %45 = arith.mulf %40, %44 : vector<16x16xf32>
    %46 = math.floor %45 : vector<16x16xf32>
    %47 = arith.cmpf oeq, %43, %46 : vector<16x16xf32>
    %cst_14 = arith.constant 0.000000e+00 : f32
    %cst_15 = arith.constant -1.000000e+09 : f32
    %48 = vector.broadcast %cst_14 : f32 to vector<16x16xf32>
    %49 = vector.broadcast %cst_15 : f32 to vector<16x16xf32>
    %50 = arith.select %47, %48, %49 : vector<16x16xi1>, vector<16x16xf32>
    %c0_i32 = arith.constant 0 : i32
    %51 = vector.broadcast %c0_i32 : i32 to vector<1x16xi32>
    %52 = arith.cmpi ne, %1, %51 : vector<1x16xi32>
    %cst_16 = arith.constant 0.000000e+00 : f32
    %cst_17 = arith.constant -1.000000e+09 : f32
    %53 = vector.broadcast %cst_16 : f32 to vector<1x16xf32>
    %54 = vector.broadcast %cst_17 : f32 to vector<1x16xf32>
    %55 = arith.select %52, %53, %54 : vector<1x16xi1>, vector<1x16xf32>
    %56 = vector.broadcast %55 : vector<1x16xf32> to vector<16x16xf32>
    %57 = arith.addf %50, %56 : vector<16x16xf32>
    %58 = vector.shape_cast %57 : vector<16x16xf32> to vector<1x16x16xf32>
    %59 = vector.shape_cast %58 : vector<1x16x16xf32> to vector<1x16x16xf32>
    %60 = vector.broadcast %59 : vector<1x16x16xf32> to vector<4x16x16xf32>
    %61 = vector.extract_strided_slice %3 {offsets = [2, 0], sizes = [1, 32], strides = [1, 1]} : vector<16x64xf32> to vector<1x32xf32>
    %62 = vector.extract_strided_slice %3 {offsets = [3, 0], sizes = [1, 32], strides = [1, 1]} : vector<16x64xf32> to vector<1x32xf32>
    %63 = vector.extract_strided_slice %3 {offsets = [4, 0], sizes = [1, 32], strides = [1, 1]} : vector<16x64xf32> to vector<1x32xf32>
    %64 = vector.extract_strided_slice %3 {offsets = [5, 0], sizes = [1, 64], strides = [1, 1]} : vector<16x64xf32> to vector<1x64xf32>
    %65 = vector.extract_strided_slice %3 {offsets = [6, 0], sizes = [1, 32], strides = [1, 1]} : vector<16x64xf32> to vector<1x32xf32>
    %66 = vector.extract_strided_slice %3 {offsets = [7, 0], sizes = [1, 32], strides = [1, 1]} : vector<16x64xf32> to vector<1x32xf32>
    %67 = vector.extract_strided_slice %3 {offsets = [8, 0], sizes = [1, 32], strides = [1, 1]} : vector<16x64xf32> to vector<1x32xf32>
    %c0_18 = arith.constant 0 : index
    %c0_19 = arith.constant 0 : index
    %c0_20 = arith.constant 0 : index
    %68 = vector.load %arg3[%c0_18, %c0_19, %c0_20] : memref<2x32x96xf32, #tpu.memory_space<vmem>>, vector<1x32x96xf32>
    %69 = vector.shape_cast %68 : vector<1x32x96xf32> to vector<32x96xf32>
    %cst_21 = arith.constant dense<0.000000e+00> : vector<16x96xf32>
    %70 = tpu.matmul %36, %69, %cst_21 {dimension_numbers = #tpu.dot_dimension_numbers<[1], [0], [0], [1], [0, 0, 1, 1], [], []>} : vector<16x32xf32>, vector<32x96xf32>, vector<16x96xf32> -> vector<16x96xf32>
    %71 = vector.extract_strided_slice %70 {offsets = [0, 0], sizes = [16, 24], strides = [1, 1]} : vector<16x96xf32> to vector<16x24xf32>
    %72 = vector.shape_cast %71 : vector<16x24xf32> to vector<1x16x24xf32>
    %73 = vector.extract_strided_slice %70 {offsets = [0, 24], sizes = [16, 24], strides = [1, 1]} : vector<16x96xf32> to vector<16x24xf32>
    %74 = vector.shape_cast %73 : vector<16x24xf32> to vector<1x16x24xf32>
    %75 = vector.extract_strided_slice %70 {offsets = [0, 48], sizes = [16, 24], strides = [1, 1]} : vector<16x96xf32> to vector<16x24xf32>
    %76 = vector.shape_cast %75 : vector<16x24xf32> to vector<1x16x24xf32>
    %77 = vector.extract_strided_slice %70 {offsets = [0, 72], sizes = [16, 24], strides = [1, 1]} : vector<16x96xf32> to vector<16x24xf32>
    %78 = vector.shape_cast %77 : vector<16x24xf32> to vector<1x16x24xf32>
    %79 = tpu.concatenate %72, %74, %76, %78 in 0 : vector<1x16x24xf32>, vector<1x16x24xf32>, vector<1x16x24xf32>, vector<1x16x24xf32> -> vector<4x16x24xf32>
    %80 = vector.extract_strided_slice %79 {offsets = [0, 0, 0], sizes = [4, 16, 8], strides = [1, 1, 1]} : vector<4x16x24xf32> to vector<4x16x8xf32>
    %81 = vector.extract_strided_slice %79 {offsets = [0, 0, 8], sizes = [4, 16, 8], strides = [1, 1, 1]} : vector<4x16x24xf32> to vector<4x16x8xf32>
    %82 = vector.extract_strided_slice %79 {offsets = [0, 0, 16], sizes = [4, 16, 8], strides = [1, 1, 1]} : vector<4x16x24xf32> to vector<4x16x8xf32>
    "tpu.trace_start"() <{level = 10 : i32, message = "nqd,nkd->nqk"}> : () -> ()
    %cst_22 = arith.constant dense<0.000000e+00> : vector<4x16x16xf32>
    %83 = tpu.matmul %80, %81, %cst_22 {dimension_numbers = #tpu.dot_dimension_numbers<[2], [2], [1], [1], [0, 0, 0, 1, 1, 1], [0], [0]>} : vector<4x16x8xf32>, vector<4x16x8xf32>, vector<4x16x16xf32> -> vector<4x16x16xf32>
    "tpu.trace_stop"() : () -> ()
    %84 = arith.addf %83, %60 : vector<4x16x16xf32>
    %cst_23 = arith.constant dense<0xFF800000> : vector<4x16xf32>
    %85 = vector.multi_reduction <maximumf>, %84, %cst_23 [2] : vector<4x16x16xf32> to vector<4x16xf32>
    %86 = vector.shape_cast %85 : vector<4x16xf32> to vector<4x16x1xf32>
    %87 = vector.broadcast %86 : vector<4x16x1xf32> to vector<4x16x16xf32>
    %88 = arith.subf %84, %87 : vector<4x16x16xf32>
    %89 = math.exp %88 : vector<4x16x16xf32>
    %cst_24 = arith.constant dense<0.000000e+00> : vector<4x16xf32>
    %90 = vector.multi_reduction <add>, %89, %cst_24 [2] : vector<4x16x16xf32> to vector<4x16xf32>
    %91 = vector.shape_cast %90 : vector<4x16xf32> to vector<4x16x1xf32>
    %92 = tpu.reciprocal %91 {approx = true} : vector<4x16x1xf32> -> vector<4x16x1xf32>
    %93 = arith.mulf %91, %92 : vector<4x16x1xf32>
    %cst_25 = arith.constant 2.000000e+00 : f32
    %94 = vector.broadcast %cst_25 : f32 to vector<4x16x1xf32>
    %95 = arith.subf %94, %93 : vector<4x16x1xf32>
    %96 = arith.mulf %92, %95 : vector<4x16x1xf32>
    %97 = vector.broadcast %96 : vector<4x16x1xf32> to vector<4x16x16xf32>
    %98 = arith.mulf %89, %97 : vector<4x16x16xf32>
    "tpu.trace_start"() <{level = 10 : i32, message = "nqk,nkd->nqd"}> : () -> ()
    %cst_26 = arith.constant dense<0.000000e+00> : vector<4x16x8xf32>
    %99 = tpu.matmul %98, %82, %cst_26 {dimension_numbers = #tpu.dot_dimension_numbers<[2], [1], [1], [2], [0, 0, 0, 1, 1, 2], [0], [0]>} : vector<4x16x16xf32>, vector<4x16x8xf32>, vector<4x16x8xf32> -> vector<4x16x8xf32>
    "tpu.trace_stop"() : () -> ()
    %100 = vector.extract_strided_slice %99 {offsets = [0, 0, 0], sizes = [1, 16, 8], strides = [1, 1, 1]} : vector<4x16x8xf32> to vector<1x16x8xf32>
    %101 = vector.shape_cast %100 : vector<1x16x8xf32> to vector<16x8xf32>
    %102 = vector.extract_strided_slice %99 {offsets = [1, 0, 0], sizes = [1, 16, 8], strides = [1, 1, 1]} : vector<4x16x8xf32> to vector<1x16x8xf32>
    %103 = vector.shape_cast %102 : vector<1x16x8xf32> to vector<16x8xf32>
    %104 = vector.extract_strided_slice %99 {offsets = [2, 0, 0], sizes = [1, 16, 8], strides = [1, 1, 1]} : vector<4x16x8xf32> to vector<1x16x8xf32>
    %105 = vector.shape_cast %104 : vector<1x16x8xf32> to vector<16x8xf32>
    %106 = vector.extract_strided_slice %99 {offsets = [3, 0, 0], sizes = [1, 16, 8], strides = [1, 1, 1]} : vector<4x16x8xf32> to vector<1x16x8xf32>
    %107 = vector.shape_cast %106 : vector<1x16x8xf32> to vector<16x8xf32>
    %108 = tpu.concatenate %101, %103, %105, %107 in 1 : vector<16x8xf32>, vector<16x8xf32>, vector<16x8xf32>, vector<16x8xf32> -> vector<16x32xf32>
    %c0_27 = arith.constant 0 : index
    %c0_28 = arith.constant 0 : index
    %c0_29 = arith.constant 0 : index
    %109 = vector.load %arg4[%c0_27, %c0_28, %c0_29] : memref<2x32x32xf32, #tpu.memory_space<vmem>>, vector<1x32x32xf32>
    %110 = vector.shape_cast %109 : vector<1x32x32xf32> to vector<32x32xf32>
    %cst_30 = arith.constant dense<0.000000e+00> : vector<16x32xf32>
    %111 = tpu.matmul %108, %110, %cst_30 {dimension_numbers = #tpu.dot_dimension_numbers<[1], [0], [0], [1], [0, 0, 1, 1], [], []>} : vector<16x32xf32>, vector<32x32xf32>, vector<16x32xf32> -> vector<16x32xf32>
    %112 = vector.broadcast %61 : vector<1x32xf32> to vector<16x32xf32>
    %113 = arith.addf %111, %112 : vector<16x32xf32>
    %114 = arith.addf %113, %36 : vector<16x32xf32>
    %cst_31 = arith.constant dense<0.000000e+00> : vector<16xf32>
    %115 = vector.multi_reduction <add>, %114, %cst_31 [1] : vector<16x32xf32> to vector<16xf32>
    %116 = vector.shape_cast %115 : vector<16xf32> to vector<16x1xf32>
    %cst_32 = arith.constant 3.200000e+01 : f32
    %117 = vector.broadcast %cst_32 : f32 to vector<16x1xf32>
    %118 = arith.divf %116, %117 : vector<16x1xf32>
    %119 = vector.broadcast %118 : vector<16x1xf32> to vector<16x32xf32>
    %120 = arith.subf %114, %119 : vector<16x32xf32>
    %121 = arith.mulf %120, %120 : vector<16x32xf32>
    %cst_33 = arith.constant dense<0.000000e+00> : vector<16xf32>
    %122 = vector.multi_reduction <add>, %121, %cst_33 [1] : vector<16x32xf32> to vector<16xf32>
    %123 = vector.shape_cast %122 : vector<16xf32> to vector<16x1xf32>
    %cst_34 = arith.constant 3.200000e+01 : f32
    %124 = vector.broadcast %cst_34 : f32 to vector<16x1xf32>
    %125 = arith.divf %123, %124 : vector<16x1xf32>
    %126 = vector.broadcast %118 : vector<16x1xf32> to vector<16x32xf32>
    %127 = arith.subf %114, %126 : vector<16x32xf32>
    %cst_35 = arith.constant 9.99999997E-7 : f32
    %128 = vector.broadcast %cst_35 : f32 to vector<16x1xf32>
    %129 = arith.addf %125, %128 : vector<16x1xf32>
    %130 = math.rsqrt %129 : vector<16x1xf32>
    %131 = vector.broadcast %130 : vector<16x1xf32> to vector<16x32xf32>
    %132 = arith.mulf %127, %131 : vector<16x32xf32>
    %133 = vector.broadcast %62 : vector<1x32xf32> to vector<16x32xf32>
    %134 = arith.mulf %132, %133 : vector<16x32xf32>
    %135 = vector.broadcast %63 : vector<1x32xf32> to vector<16x32xf32>
    %136 = arith.addf %134, %135 : vector<16x32xf32>
    %c0_36 = arith.constant 0 : index
    %c0_37 = arith.constant 0 : index
    %c0_38 = arith.constant 0 : index
    %137 = vector.load %arg5[%c0_36, %c0_37, %c0_38] : memref<2x32x64xf32, #tpu.memory_space<vmem>>, vector<1x32x64xf32>
    %138 = vector.shape_cast %137 : vector<1x32x64xf32> to vector<32x64xf32>
    %cst_39 = arith.constant dense<0.000000e+00> : vector<16x64xf32>
    %139 = tpu.matmul %136, %138, %cst_39 {dimension_numbers = #tpu.dot_dimension_numbers<[1], [0], [0], [1], [0, 0, 1, 1], [], []>} : vector<16x32xf32>, vector<32x64xf32>, vector<16x64xf32> -> vector<16x64xf32>
    %140 = vector.broadcast %64 : vector<1x64xf32> to vector<16x64xf32>
    %141 = arith.addf %139, %140 : vector<16x64xf32>
    %cst_40 = arith.constant 0.000000e+00 : f32
    %142 = vector.broadcast %cst_40 : f32 to vector<16x64xf32>
    %143 = arith.maximumf %141, %142 : vector<16x64xf32>
    %c0_41 = arith.constant 0 : index
    %c0_42 = arith.constant 0 : index
    %c0_43 = arith.constant 0 : index
    %144 = vector.load %arg6[%c0_41, %c0_42, %c0_43] : memref<2x64x32xf32, #tpu.memory_space<vmem>>, vector<1x64x32xf32>
    %145 = vector.shape_cast %144 : vector<1x64x32xf32> to vector<64x32xf32>
    %cst_44 = arith.constant dense<0.000000e+00> : vector<16x32xf32>
    %146 = tpu.matmul %143, %145, %cst_44 {dimension_numbers = #tpu.dot_dimension_numbers<[1], [0], [0], [1], [0, 0, 1, 1], [], []>} : vector<16x64xf32>, vector<64x32xf32>, vector<16x32xf32> -> vector<16x32xf32>
    %147 = vector.broadcast %65 : vector<1x32xf32> to vector<16x32xf32>
    %148 = arith.addf %146, %147 : vector<16x32xf32>
    %149 = arith.addf %148, %136 : vector<16x32xf32>
    %cst_45 = arith.constant dense<0.000000e+00> : vector<16xf32>
    %150 = vector.multi_reduction <add>, %149, %cst_45 [1] : vector<16x32xf32> to vector<16xf32>
    %151 = vector.shape_cast %150 : vector<16xf32> to vector<16x1xf32>
    %cst_46 = arith.constant 3.200000e+01 : f32
    %152 = vector.broadcast %cst_46 : f32 to vector<16x1xf32>
    %153 = arith.divf %151, %152 : vector<16x1xf32>
    %154 = vector.broadcast %153 : vector<16x1xf32> to vector<16x32xf32>
    %155 = arith.subf %149, %154 : vector<16x32xf32>
    %156 = arith.mulf %155, %155 : vector<16x32xf32>
    %cst_47 = arith.constant dense<0.000000e+00> : vector<16xf32>
    %157 = vector.multi_reduction <add>, %156, %cst_47 [1] : vector<16x32xf32> to vector<16xf32>
    %158 = vector.shape_cast %157 : vector<16xf32> to vector<16x1xf32>
    %cst_48 = arith.constant 3.200000e+01 : f32
    %159 = vector.broadcast %cst_48 : f32 to vector<16x1xf32>
    %160 = arith.divf %158, %159 : vector<16x1xf32>
    %161 = vector.broadcast %153 : vector<16x1xf32> to vector<16x32xf32>
    %162 = arith.subf %149, %161 : vector<16x32xf32>
    %cst_49 = arith.constant 9.99999997E-7 : f32
    %163 = vector.broadcast %cst_49 : f32 to vector<16x1xf32>
    %164 = arith.addf %160, %163 : vector<16x1xf32>
    %165 = math.rsqrt %164 : vector<16x1xf32>
    %166 = vector.broadcast %165 : vector<16x1xf32> to vector<16x32xf32>
    %167 = arith.mulf %162, %166 : vector<16x32xf32>
    %168 = vector.broadcast %66 : vector<1x32xf32> to vector<16x32xf32>
    %169 = arith.mulf %167, %168 : vector<16x32xf32>
    %170 = vector.broadcast %67 : vector<1x32xf32> to vector<16x32xf32>
    %171 = arith.addf %169, %170 : vector<16x32xf32>
    %172 = vector.extract_strided_slice %3 {offsets = [9, 0], sizes = [1, 32], strides = [1, 1]} : vector<16x64xf32> to vector<1x32xf32>
    %173 = vector.extract_strided_slice %3 {offsets = [10, 0], sizes = [1, 32], strides = [1, 1]} : vector<16x64xf32> to vector<1x32xf32>
    %174 = vector.extract_strided_slice %3 {offsets = [11, 0], sizes = [1, 32], strides = [1, 1]} : vector<16x64xf32> to vector<1x32xf32>
    %175 = vector.extract_strided_slice %3 {offsets = [12, 0], sizes = [1, 64], strides = [1, 1]} : vector<16x64xf32> to vector<1x64xf32>
    %176 = vector.extract_strided_slice %3 {offsets = [13, 0], sizes = [1, 32], strides = [1, 1]} : vector<16x64xf32> to vector<1x32xf32>
    %177 = vector.extract_strided_slice %3 {offsets = [14, 0], sizes = [1, 32], strides = [1, 1]} : vector<16x64xf32> to vector<1x32xf32>
    %178 = vector.extract_strided_slice %3 {offsets = [15, 0], sizes = [1, 32], strides = [1, 1]} : vector<16x64xf32> to vector<1x32xf32>
    %c1 = arith.constant 1 : index
    %c0_50 = arith.constant 0 : index
    %c0_51 = arith.constant 0 : index
    %179 = vector.load %arg3[%c1, %c0_50, %c0_51] : memref<2x32x96xf32, #tpu.memory_space<vmem>>, vector<1x32x96xf32>
    %180 = vector.shape_cast %179 : vector<1x32x96xf32> to vector<32x96xf32>
    %cst_52 = arith.constant dense<0.000000e+00> : vector<16x96xf32>
    %181 = tpu.matmul %171, %180, %cst_52 {dimension_numbers = #tpu.dot_dimension_numbers<[1], [0], [0], [1], [0, 0, 1, 1], [], []>} : vector<16x32xf32>, vector<32x96xf32>, vector<16x96xf32> -> vector<16x96xf32>
    %182 = vector.extract_strided_slice %181 {offsets = [0, 0], sizes = [16, 24], strides = [1, 1]} : vector<16x96xf32> to vector<16x24xf32>
    %183 = vector.shape_cast %182 : vector<16x24xf32> to vector<1x16x24xf32>
    %184 = vector.extract_strided_slice %181 {offsets = [0, 24], sizes = [16, 24], strides = [1, 1]} : vector<16x96xf32> to vector<16x24xf32>
    %185 = vector.shape_cast %184 : vector<16x24xf32> to vector<1x16x24xf32>
    %186 = vector.extract_strided_slice %181 {offsets = [0, 48], sizes = [16, 24], strides = [1, 1]} : vector<16x96xf32> to vector<16x24xf32>
    %187 = vector.shape_cast %186 : vector<16x24xf32> to vector<1x16x24xf32>
    %188 = vector.extract_strided_slice %181 {offsets = [0, 72], sizes = [16, 24], strides = [1, 1]} : vector<16x96xf32> to vector<16x24xf32>
    %189 = vector.shape_cast %188 : vector<16x24xf32> to vector<1x16x24xf32>
    %190 = tpu.concatenate %183, %185, %187, %189 in 0 : vector<1x16x24xf32>, vector<1x16x24xf32>, vector<1x16x24xf32>, vector<1x16x24xf32> -> vector<4x16x24xf32>
    %191 = vector.extract_strided_slice %190 {offsets = [0, 0, 0], sizes = [4, 16, 8], strides = [1, 1, 1]} : vector<4x16x24xf32> to vector<4x16x8xf32>
    %192 = vector.extract_strided_slice %190 {offsets = [0, 0, 8], sizes = [4, 16, 8], strides = [1, 1, 1]} : vector<4x16x24xf32> to vector<4x16x8xf32>
    %193 = vector.extract_strided_slice %190 {offsets = [0, 0, 16], sizes = [4, 16, 8], strides = [1, 1, 1]} : vector<4x16x24xf32> to vector<4x16x8xf32>
    "tpu.trace_start"() <{level = 10 : i32, message = "nqd,nkd->nqk"}> : () -> ()
    %cst_53 = arith.constant dense<0.000000e+00> : vector<4x16x16xf32>
    %194 = tpu.matmul %191, %192, %cst_53 {dimension_numbers = #tpu.dot_dimension_numbers<[2], [2], [1], [1], [0, 0, 0, 1, 1, 1], [0], [0]>} : vector<4x16x8xf32>, vector<4x16x8xf32>, vector<4x16x16xf32> -> vector<4x16x16xf32>
    "tpu.trace_stop"() : () -> ()
    %195 = arith.addf %194, %60 : vector<4x16x16xf32>
    %cst_54 = arith.constant dense<0xFF800000> : vector<4x16xf32>
    %196 = vector.multi_reduction <maximumf>, %195, %cst_54 [2] : vector<4x16x16xf32> to vector<4x16xf32>
    %197 = vector.shape_cast %196 : vector<4x16xf32> to vector<4x16x1xf32>
    %198 = vector.broadcast %197 : vector<4x16x1xf32> to vector<4x16x16xf32>
    %199 = arith.subf %195, %198 : vector<4x16x16xf32>
    %200 = math.exp %199 : vector<4x16x16xf32>
    %cst_55 = arith.constant dense<0.000000e+00> : vector<4x16xf32>
    %201 = vector.multi_reduction <add>, %200, %cst_55 [2] : vector<4x16x16xf32> to vector<4x16xf32>
    %202 = vector.shape_cast %201 : vector<4x16xf32> to vector<4x16x1xf32>
    %203 = tpu.reciprocal %202 {approx = true} : vector<4x16x1xf32> -> vector<4x16x1xf32>
    %204 = arith.mulf %202, %203 : vector<4x16x1xf32>
    %cst_56 = arith.constant 2.000000e+00 : f32
    %205 = vector.broadcast %cst_56 : f32 to vector<4x16x1xf32>
    %206 = arith.subf %205, %204 : vector<4x16x1xf32>
    %207 = arith.mulf %203, %206 : vector<4x16x1xf32>
    %208 = vector.broadcast %207 : vector<4x16x1xf32> to vector<4x16x16xf32>
    %209 = arith.mulf %200, %208 : vector<4x16x16xf32>
    "tpu.trace_start"() <{level = 10 : i32, message = "nqk,nkd->nqd"}> : () -> ()
    %cst_57 = arith.constant dense<0.000000e+00> : vector<4x16x8xf32>
    %210 = tpu.matmul %209, %193, %cst_57 {dimension_numbers = #tpu.dot_dimension_numbers<[2], [1], [1], [2], [0, 0, 0, 1, 1, 2], [0], [0]>} : vector<4x16x16xf32>, vector<4x16x8xf32>, vector<4x16x8xf32> -> vector<4x16x8xf32>
    "tpu.trace_stop"() : () -> ()
    %211 = vector.extract_strided_slice %210 {offsets = [0, 0, 0], sizes = [1, 16, 8], strides = [1, 1, 1]} : vector<4x16x8xf32> to vector<1x16x8xf32>
    %212 = vector.shape_cast %211 : vector<1x16x8xf32> to vector<16x8xf32>
    %213 = vector.extract_strided_slice %210 {offsets = [1, 0, 0], sizes = [1, 16, 8], strides = [1, 1, 1]} : vector<4x16x8xf32> to vector<1x16x8xf32>
    %214 = vector.shape_cast %213 : vector<1x16x8xf32> to vector<16x8xf32>
    %215 = vector.extract_strided_slice %210 {offsets = [2, 0, 0], sizes = [1, 16, 8], strides = [1, 1, 1]} : vector<4x16x8xf32> to vector<1x16x8xf32>
    %216 = vector.shape_cast %215 : vector<1x16x8xf32> to vector<16x8xf32>
    %217 = vector.extract_strided_slice %210 {offsets = [3, 0, 0], sizes = [1, 16, 8], strides = [1, 1, 1]} : vector<4x16x8xf32> to vector<1x16x8xf32>
    %218 = vector.shape_cast %217 : vector<1x16x8xf32> to vector<16x8xf32>
    %219 = tpu.concatenate %212, %214, %216, %218 in 1 : vector<16x8xf32>, vector<16x8xf32>, vector<16x8xf32>, vector<16x8xf32> -> vector<16x32xf32>
    %c1_58 = arith.constant 1 : index
    %c0_59 = arith.constant 0 : index
    %c0_60 = arith.constant 0 : index
    %220 = vector.load %arg4[%c1_58, %c0_59, %c0_60] : memref<2x32x32xf32, #tpu.memory_space<vmem>>, vector<1x32x32xf32>
    %221 = vector.shape_cast %220 : vector<1x32x32xf32> to vector<32x32xf32>
    %cst_61 = arith.constant dense<0.000000e+00> : vector<16x32xf32>
    %222 = tpu.matmul %219, %221, %cst_61 {dimension_numbers = #tpu.dot_dimension_numbers<[1], [0], [0], [1], [0, 0, 1, 1], [], []>} : vector<16x32xf32>, vector<32x32xf32>, vector<16x32xf32> -> vector<16x32xf32>
    %223 = vector.broadcast %172 : vector<1x32xf32> to vector<16x32xf32>
    %224 = arith.addf %222, %223 : vector<16x32xf32>
    %225 = arith.addf %224, %171 : vector<16x32xf32>
    %cst_62 = arith.constant dense<0.000000e+00> : vector<16xf32>
    %226 = vector.multi_reduction <add>, %225, %cst_62 [1] : vector<16x32xf32> to vector<16xf32>
    %227 = vector.shape_cast %226 : vector<16xf32> to vector<16x1xf32>
    %cst_63 = arith.constant 3.200000e+01 : f32
    %228 = vector.broadcast %cst_63 : f32 to vector<16x1xf32>
    %229 = arith.divf %227, %228 : vector<16x1xf32>
    %230 = vector.broadcast %229 : vector<16x1xf32> to vector<16x32xf32>
    %231 = arith.subf %225, %230 : vector<16x32xf32>
    %232 = arith.mulf %231, %231 : vector<16x32xf32>
    %cst_64 = arith.constant dense<0.000000e+00> : vector<16xf32>
    %233 = vector.multi_reduction <add>, %232, %cst_64 [1] : vector<16x32xf32> to vector<16xf32>
    %234 = vector.shape_cast %233 : vector<16xf32> to vector<16x1xf32>
    %cst_65 = arith.constant 3.200000e+01 : f32
    %235 = vector.broadcast %cst_65 : f32 to vector<16x1xf32>
    %236 = arith.divf %234, %235 : vector<16x1xf32>
    %237 = vector.broadcast %229 : vector<16x1xf32> to vector<16x32xf32>
    %238 = arith.subf %225, %237 : vector<16x32xf32>
    %cst_66 = arith.constant 9.99999997E-7 : f32
    %239 = vector.broadcast %cst_66 : f32 to vector<16x1xf32>
    %240 = arith.addf %236, %239 : vector<16x1xf32>
    %241 = math.rsqrt %240 : vector<16x1xf32>
    %242 = vector.broadcast %241 : vector<16x1xf32> to vector<16x32xf32>
    %243 = arith.mulf %238, %242 : vector<16x32xf32>
    %244 = vector.broadcast %173 : vector<1x32xf32> to vector<16x32xf32>
    %245 = arith.mulf %243, %244 : vector<16x32xf32>
    %246 = vector.broadcast %174 : vector<1x32xf32> to vector<16x32xf32>
    %247 = arith.addf %245, %246 : vector<16x32xf32>
    %c1_67 = arith.constant 1 : index
    %c0_68 = arith.constant 0 : index
    %c0_69 = arith.constant 0 : index
    %248 = vector.load %arg5[%c1_67, %c0_68, %c0_69] : memref<2x32x64xf32, #tpu.memory_space<vmem>>, vector<1x32x64xf32>
    %249 = vector.shape_cast %248 : vector<1x32x64xf32> to vector<32x64xf32>
    %cst_70 = arith.constant dense<0.000000e+00> : vector<16x64xf32>
    %250 = tpu.matmul %247, %249, %cst_70 {dimension_numbers = #tpu.dot_dimension_numbers<[1], [0], [0], [1], [0, 0, 1, 1], [], []>} : vector<16x32xf32>, vector<32x64xf32>, vector<16x64xf32> -> vector<16x64xf32>
    %251 = vector.broadcast %175 : vector<1x64xf32> to vector<16x64xf32>
    %252 = arith.addf %250, %251 : vector<16x64xf32>
    %cst_71 = arith.constant 0.000000e+00 : f32
    %253 = vector.broadcast %cst_71 : f32 to vector<16x64xf32>
    %254 = arith.maximumf %252, %253 : vector<16x64xf32>
    %c1_72 = arith.constant 1 : index
    %c0_73 = arith.constant 0 : index
    %c0_74 = arith.constant 0 : index
    %255 = vector.load %arg6[%c1_72, %c0_73, %c0_74] : memref<2x64x32xf32, #tpu.memory_space<vmem>>, vector<1x64x32xf32>
    %256 = vector.shape_cast %255 : vector<1x64x32xf32> to vector<64x32xf32>
    %cst_75 = arith.constant dense<0.000000e+00> : vector<16x32xf32>
    %257 = tpu.matmul %254, %256, %cst_75 {dimension_numbers = #tpu.dot_dimension_numbers<[1], [0], [0], [1], [0, 0, 1, 1], [], []>} : vector<16x64xf32>, vector<64x32xf32>, vector<16x32xf32> -> vector<16x32xf32>
    %258 = vector.broadcast %176 : vector<1x32xf32> to vector<16x32xf32>
    %259 = arith.addf %257, %258 : vector<16x32xf32>
    %260 = arith.addf %259, %247 : vector<16x32xf32>
    %cst_76 = arith.constant dense<0.000000e+00> : vector<16xf32>
    %261 = vector.multi_reduction <add>, %260, %cst_76 [1] : vector<16x32xf32> to vector<16xf32>
    %262 = vector.shape_cast %261 : vector<16xf32> to vector<16x1xf32>
    %cst_77 = arith.constant 3.200000e+01 : f32
    %263 = vector.broadcast %cst_77 : f32 to vector<16x1xf32>
    %264 = arith.divf %262, %263 : vector<16x1xf32>
    %265 = vector.broadcast %264 : vector<16x1xf32> to vector<16x32xf32>
    %266 = arith.subf %260, %265 : vector<16x32xf32>
    %267 = arith.mulf %266, %266 : vector<16x32xf32>
    %cst_78 = arith.constant dense<0.000000e+00> : vector<16xf32>
    %268 = vector.multi_reduction <add>, %267, %cst_78 [1] : vector<16x32xf32> to vector<16xf32>
    %269 = vector.shape_cast %268 : vector<16xf32> to vector<16x1xf32>
    %cst_79 = arith.constant 3.200000e+01 : f32
    %270 = vector.broadcast %cst_79 : f32 to vector<16x1xf32>
    %271 = arith.divf %269, %270 : vector<16x1xf32>
    %272 = vector.broadcast %264 : vector<16x1xf32> to vector<16x32xf32>
    %273 = arith.subf %260, %272 : vector<16x32xf32>
    %cst_80 = arith.constant 9.99999997E-7 : f32
    %274 = vector.broadcast %cst_80 : f32 to vector<16x1xf32>
    %275 = arith.addf %271, %274 : vector<16x1xf32>
    %276 = math.rsqrt %275 : vector<16x1xf32>
    %277 = vector.broadcast %276 : vector<16x1xf32> to vector<16x32xf32>
    %278 = arith.mulf %273, %277 : vector<16x32xf32>
    %279 = vector.broadcast %177 : vector<1x32xf32> to vector<16x32xf32>
    %280 = arith.mulf %278, %279 : vector<16x32xf32>
    %281 = vector.broadcast %178 : vector<1x32xf32> to vector<16x32xf32>
    %282 = arith.addf %280, %281 : vector<16x32xf32>
    %c0_81 = arith.constant 0 : index
    %c0_82 = arith.constant 0 : index
    %283 = vector.load %arg8[%c0_81, %c0_82] : memref<16x32xf32, #tpu.memory_space<vmem>>, vector<16x32xf32>
    tpu.vector_store %arg8[%c0_81, %c0_82], %282 {strides = array<i32>} : memref<16x32xf32, #tpu.memory_space<vmem>>, vector<16x32xf32>,
    return
  }
}

</mosaic_0001>

<llo_original>
// kernel: transformer_encoder.1
$region0: #{transformer_encoder.1}
  #allocation0 [shape = 'u32[]', space=smem, size = 0x4, offset = 0x4, fixed_abs, tag = 'smem constant byte address 0x4 - core index']
  #allocation1 [shape = 'u32[72,128]{1,0:T(1,128)}', space=vmem, size = 0x9000, scoped, tag = 'internal scratch']
  %s0 = inlined_call_operand.vmem [shape: s32[16,1], index: 0, kind: input, shape index: {}]
  %s1 = inlined_call_operand.vmem [shape: s32[1,16], index: 1, kind: input, shape index: {}]
  %s2 = inlined_call_operand.vmem [shape: f32[72,32], index: 2, kind: input, shape index: {}]
  %s3 = inlined_call_operand.vmem [shape: f32[2,32,96], index: 3, kind: input, shape index: {}]
  %s4 = inlined_call_operand.vmem [shape: f32[2,32,32], index: 4, kind: input, shape index: {}]
  %s5 = inlined_call_operand.vmem [shape: f32[2,32,64], index: 5, kind: input, shape index: {}]
  %s6 = inlined_call_operand.vmem [shape: f32[2,64,32], index: 6, kind: input, shape index: {}]
  %s7 = inlined_call_operand.vmem [shape: f32[16,64], index: 7, kind: input, shape index: {}]
  %s8 = inlined_call_operand.hbm [shape: f32[16,32], index: 8, kind: output, shape index: {}]
  %s9 = sld [smem:[#allocation0]]
  $region42: #{transformer_encoder.1} parent=0
    _
  %s11 = ssub.s32 1, %s9
  %s12 = scalar_select 0, %s11, %s9
  $region1: #{transformer_encoder.1} parent=0
    #allocation2 [shape = 'u8[8192]{0}', space=vmem, size = 0x2000, scoped, tag = 'output window, operand 0, single buffered']
    #allocation3 [shape = 's32[1]{0}', space=sflag, size = 0x4, scoped, tag = 'scoped memory for transformer_encoder.1']
    %13 = vsyncpa [#allocation3], 0
    // Predicated region
    $region2: #{transformer_encoder.1} parent=1 // pred_check
      _
    $region3: #{transformer_encoder.1} parent=1 // pred_check_branch
      %15 = sbr.rel (0) target = $region5
    $region4: #{transformer_encoder.1} parent=1 // pred_region
      _
    $region5: #{transformer_encoder.1} parent=1 // pred_fallthru
      _
    // Predicated region
    $region6: #{transformer_encoder.1} parent=1 // pred_check
      _
    $region7: #{transformer_encoder.1} parent=1 // pred_check_branch
      %17 = sbr.rel (0) target = $region9
    $region8: #{transformer_encoder.1} parent=1 // pred_region
      _
    $region9: #{transformer_encoder.1} parent=1 // pred_fallthru
      _
    // Predicated region
    $region10: #{transformer_encoder.1} parent=1 // pred_check
      _
    $region11: #{transformer_encoder.1} parent=1 // pred_check_branch
      %19 = sbr.rel (0) target = $region13
    $region12: #{transformer_encoder.1} parent=1 // pred_region
      _
    $region13: #{transformer_encoder.1} parent=1 // pred_fallthru
      _
    // Predicated region
    $region14: #{transformer_encoder.1} parent=1 // pred_check
      _
    $region15: #{transformer_encoder.1} parent=1 // pred_check_branch
      %21 = sbr.rel (0) target = $region17
    $region16: #{transformer_encoder.1} parent=1 // pred_region
      _
    $region17: #{transformer_encoder.1} parent=1 // pred_fallthru
      _
    // Predicated region
    $region18: #{transformer_encoder.1} parent=1 // pred_check
      _
    $region19: #{transformer_encoder.1} parent=1 // pred_check_branch
      %23 = sbr.rel (0) target = $region21
    $region20: #{transformer_encoder.1} parent=1 // pred_region
      _
    $region21: #{transformer_encoder.1} parent=1 // pred_fallthru
      _
    // Predicated region
    $region22: #{transformer_encoder.1} parent=1 // pred_check
      _
    $region23: #{transformer_encoder.1} parent=1 // pred_check_branch
      %25 = sbr.rel (0) target = $region25
    $region24: #{transformer_encoder.1} parent=1 // pred_region
      _
    $region25: #{transformer_encoder.1} parent=1 // pred_fallthru
      _
    // Predicated region
    $region26: #{transformer_encoder.1} parent=1 // pred_check
      _
    $region27: #{transformer_encoder.1} parent=1 // pred_check_branch
      %27 = sbr.rel (0) target = $region29
    $region28: #{transformer_encoder.1} parent=1 // pred_region
      _
    $region29: #{transformer_encoder.1} parent=1 // pred_fallthru
      _
    // Predicated region
    $region30: #{transformer_encoder.1} parent=1 // pred_check
      _
    $region31: #{transformer_encoder.1} parent=1 // pred_check_branch
      %29 = sbr.rel (0) target = $region33
    $region32: #{transformer_encoder.1} parent=1 // pred_region
      _
    $region33: #{transformer_encoder.1} parent=1 // pred_fallthru
      _
    %v30 = vld [vmem:[%s0] sm:$0xff]
    %v31 = vld [vmem:[%s0 + $0x8] sm:$0xff]
    %v32 = vld [vmem:[%s1] sm:$0x1]
    %v33 = vld [vmem:[%s2] sm:$0xff]
    %v34 = vld [vmem:[%s2 + $0x8] sm:$0xff]
    %v35 = vld [vmem:[%s2 + $0x10] sm:$0xff]
    %v36 = vld [vmem:[%s2 + $0x18] sm:$0xff]
    %v37 = vld [vmem:[%s2 + $0x20] sm:$0xff]
    %v38 = vld [vmem:[%s2 + $0x28] sm:$0xff]
    %v39 = vld [vmem:[%s2 + $0x30] sm:$0xff]
    %v40 = vld [vmem:[%s2 + $0x38] sm:$0xff]
    %v41 = vld [vmem:[%s2 + $0x40] sm:$0xff]
    %v42 = vld [vmem:[%s7] sm:$0xff]
    %v43 = vld [vmem:[%s7 + $0x8] sm:$0xff]
    %v44 = vlaneseq
    %v45 = vand.u32 %v44, 127
    %46 = vset.pattern.permute.xlu0 0
    %47 = vperm.xlu0 %46, %v30
    %v48 = vpop.permute.xlu0 %47
    %49 = vset.pattern.permute.xlu0 0
    %50 = vperm.xlu0 %49, %v31
    %v51 = vpop.permute.xlu0 %50
    %vm52 = vcmp.eq.s32.totalorder %v48, %v45
    %vm53 = vcmp.eq.s32.totalorder %v51, %v45
    %v54 = vsel %vm52, 1, 0
    %v55 = vsel %vm53, 1, 0
    %v56 = vcvt.s32.f32 %v54
    %v57 = vcvt.s32.f32 %v55
    %vm58 = vcmask 457728
    %v60 = vsel %vm58, %v56, 0
    %v63 = vsel %vm58, %v57, 0
    %65 = vmatpush.msra.mxu0 0.0
    %66 = vmatpush.msra.mxu0 0.0
    %67 = vmatpush.msra.mxu0 0.0
    %68 = vmatpush.msra.mxu0 0.0
    %69 = vmatpush.msra.mxu0 0.0
    %70 = vmatpush.msra.mxu0 0.0
    %71 = vmatpush.msra.mxu0 0.0
    %72 = vmatpush.msra.mxu0 0.0
    %73 = vmatpush.msra.mxu0 0.0
    %74 = vmatpush.msra.mxu0 %v39
    %75 = vmatpush.msra.mxu0 %v38
    %76 = vmatpush.msra.mxu0 %v37
    %77 = vmatpush.msra.mxu0 %v36
    %78 = vmatpush.msra.mxu0 %v35
    %79 = vmatpush.msra.mxu0 %v34
    %80 = vmatpush.msra.mxu0 %v33
    %81 = vmatmul.f32.gmra.mxu0 %v60
    %v82 = vpop.f32.mrf.mxu0
    %v83 = vadd.f32 %v40, %v82
    %84 = vmatmul.f32.gmra.mxu0 %v63
    %v85 = vpop.f32.mrf.mxu0
    %v86 = vadd.f32 %v41, %v85
    %87 = vdwg.mxu0
    %vm88 = vcmask 261120
    %v89 = vsel %vm88, %v83, 0.0
    %90 = vadd.xlane.f32.xlu0 %v89
    %v91 = vpop.xlane.xlu0 %90
    %v92 = vsel %vm88, %v86, 0.0
    %93 = vadd.xlane.f32.xlu0 %v92
    %v94 = vpop.xlane.xlu0 %93
    %v95 = vrcp.pop 32.0
    %v96 = vmul.f32 32.0, %v95
    %v97 = vsub.f32 1.0, %v96
    %v98 = vmul.f32 %v95, %v97
    %v99 = vadd.f32 %v95, %v98
    %vm100 = vweird.f32 %v95
    %v101 = vsel %vm100, %v95, %v99
    %v102 = vmul.f32 %v91, %v101
    %v103 = vmul.f32 %v94, %v101
    %v104 = vsub.f32 %v83, %v102
    %v105 = vsub.f32 %v86, %v103
    %v106 = vmul.f32 %v104, %v104
    %v107 = vmul.f32 %v105, %v105
    %v108 = vsel %vm88, %v106, 0.0
    %109 = vadd.xlane.f32.xlu0 %v108
    %v110 = vpop.xlane.xlu0 %109
    %v111 = vsel %vm88, %v107, 0.0
    %112 = vadd.xlane.f32.xlu0 %v111
    %v113 = vpop.xlane.xlu0 %112
    %v114 = vmul.f32 %v110, %v101
    %v115 = vmul.f32 %v113, %v101
    %v116 = vadd.f32 %v114, 1e-06
    %v117 = vadd.f32 %v115, 1e-06
    %v118 = vrsqrt.pop %v116
    %v119 = vmul.f32 %v118, %v116
    %v120 = vmul.f32 %v119, %v118
    %v121 = vmul.f32 0.5, %v120
    %v122 = vsub.f32 1.5, %v121
    %v123 = vmul.f32 %v118, %v122
    %vm124 = vweird.f32 %v116
    %vm125 = vweird.f32 %v118
    %vm126 = vmor %vm124, %vm125
    %v127 = vsel %vm126, %v118, %v123
    %v128 = vrsqrt.pop %v117
    %v129 = vmul.f32 %v128, %v117
    %v130 = vmul.f32 %v129, %v128
    %v131 = vmul.f32 0.5, %v130
    %v132 = vsub.f32 1.5, %v131
    %v133 = vmul.f32 %v128, %v132
    %vm134 = vweird.f32 %v117
    %vm135 = vweird.f32 %v128
    %vm136 = vmor %vm134, %vm135
    %v137 = vsel %vm136, %v128, %v133
    %v138 = vmul.f32 %v104, %v127
    %v139 = vmul.f32 %v105, %v137
    %v140 = vperm.slane %v42, 0
    %v141 = vmul.f32 %v138, %v140
    %v142 = vmul.f32 %v139, %v140
    %v143 = vperm.slane %v42, 1
    %v144 = vadd.f32 %v141, %v143
    %v145 = vadd.f32 %v142, %v143
    %v146 = vlaneseq
    %v147 = vshrl.u32 %v146, 7
    %v148 = vadd.s32 %v147, 8
    %v149 = vcvt.s32.f32 %v147
    %v150 = vcvt.s32.f32 %v148
    %v151 = vcvt.s32.f32 %v45
    %v152 = vmul.f32 %v149, 0.125
    %v153 = vmul.f32 %v150, 0.125
    %v154 = vfloor.f32 %v152
    %v155 = vfloor.f32 %v153
    %v156 = vmul.f32 %v151, 0.125
    %v157 = vfloor.f32 %v156
    %vm158 = vcmp.eq.f32.partialorder %v154, %v157
    %vm159 = vcmp.eq.f32.partialorder %v155, %v157
    %v160 = vsel %vm158, 0.0, -1e+09
    %v161 = vsel %vm159, 0.0, -1e+09
    %vm162 = vcmp.ne.s32.totalorder %v32, 0
    %v163 = vsel %vm162, 0.0, -1e+09
    %v165 = vperm.slane %v163, 0
    %v167 = vadd.f32 %v160, %v165
    %v168 = vadd.f32 %v161, %v165
    %v169 = vld [vmem:[%s3] sm:$0xff]
    %v170 = vld [vmem:[%s3 + $0x8] sm:$0xff]
    %v171 = vld [vmem:[%s3 + $0x10] sm:$0xff]
    %v172 = vld [vmem:[%s3 + $0x18] sm:$0xff]
    %v174 = vsel %vm88, %v144, 0
    %v177 = vsel %vm88, %v145, 0
    %179 = vmatpush.msra.mxu0 0.0
    %180 = vmatpush.msra.mxu0 0.0
    %181 = vmatpush.msra.mxu0 0.0
    %182 = vmatpush.msra.mxu0 0.0
    %183 = vmatpush.msra.mxu0 0.0
    %184 = vmatpush.msra.mxu0 0.0
    %185 = vmatpush.msra.mxu0 0.0
    %186 = vmatpush.msra.mxu0 0.0
    %187 = vmatpush.msra.mxu0 0.0
    %188 = vmatpush.msra.mxu0 0.0
    %189 = vmatpush.msra.mxu0 0.0
    %190 = vmatpush.msra.mxu0 0.0
    %191 = vmatpush.msra.mxu0 %v172
    %192 = vmatpush.msra.mxu0 %v171
    %193 = vmatpush.msra.mxu0 %v170
    %194 = vmatpush.msra.mxu0 %v169
    %195 = vmatmul.f32.gmra.mxu0 %v174
    %v196 = vpop.f32.mrf.mxu0
    %v197 = vadd.f32 0.0, %v196
    %198 = vmatmul.f32.gmra.mxu0 %v177
    %v199 = vpop.f32.mrf.mxu0
    %v200 = vadd.f32 0.0, %v199
    %201 = vdwg.mxu0
    %204 = vrot.lane.b32.xlu0 %v197, 104
    %v205 = vpop.permute.xlu0 %204
    %206 = vrot.lane.b32.xlu0 %v200, 104
    %v207 = vpop.permute.xlu0 %206
    %208 = vrot.lane.b32.xlu0 %v197, 80
    %v209 = vpop.permute.xlu0 %208
    %210 = vrot.lane.b32.xlu0 %v200, 80
    %v211 = vpop.permute.xlu0 %210
    %212 = vrot.lane.b32.xlu0 %v197, 56
    %v213 = vpop.permute.xlu0 %212
    %214 = vrot.lane.b32.xlu0 %v200, 56
    %v215 = vpop.permute.xlu0 %214
    %216 = vrot.lane.b32.xlu0 %v197, 120
    %v217 = vpop.permute.xlu0 %216
    %218 = vrot.lane.b32.xlu0 %v200, 120
    %v219 = vpop.permute.xlu0 %218
    %vm220 = vcmask 64512
    %v221 = vsel %vm220, %v197, 0
    %v223 = vsel %vm220, %v200, 0
    %v225 = vsel %vm220, %v217, 0
    %v227 = vsel %vm220, %v219, 0
    %229 = vmatpush.xpose.msra.mxu0 0.0
    %230 = vmatpush.xpose.msra.mxu0 0.0
    %231 = vmatpush.xpose.msra.mxu0 0.0
    %232 = vmatpush.xpose.msra.mxu0 0.0
    %233 = vmatpush.xpose.msra.mxu0 0.0
    %234 = vmatpush.xpose.msra.mxu0 0.0
    %235 = vmatpush.xpose.msra.mxu0 0.0
    %236 = vmatpush.xpose.msra.mxu0 0.0
    %237 = vmatpush.xpose.msra.mxu0 0.0
    %238 = vmatpush.xpose.msra.mxu0 0.0
    %239 = vmatpush.xpose.msra.mxu0 0.0
    %240 = vmatpush.xpose.msra.mxu0 0.0
    %241 = vmatpush.xpose.msra.mxu0 0.0
    %242 = vmatpush.xpose.msra.mxu0 0.0
    %243 = vmatpush.xpose.msra.mxu0 %v227
    %244 = vmatpush.xpose.msra.mxu0 %v225
    %245 = vmatmul.f32.gmra.mxu0 %v221
    %v246 = vpop.f32.mrf.mxu0
    %v247 = vadd.f32 %v167, %v246
    %248 = vmatmul.f32.gmra.mxu0 %v223
    %v249 = vpop.f32.mrf.mxu0
    %v250 = vadd.f32 %v168, %v249
    %251 = vdwg.mxu0
    %252 = vrot.lane.b32.xlu0 %v205, 120
    %v253 = vpop.permute.xlu0 %252
    %254 = vrot.lane.b32.xlu0 %v207, 120
    %v255 = vpop.permute.xlu0 %254
    %v256 = vsel %vm220, %v205, 0
    %v258 = vsel %vm220, %v207, 0
    %v260 = vsel %vm220, %v253, 0
    %v262 = vsel %vm220, %v255, 0
    %264 = vmatpush.xpose.msra.mxu0 0.0
    %265 = vmatpush.xpose.msra.mxu0 0.0
    %266 = vmatpush.xpose.msra.mxu0 0.0
    %267 = vmatpush.xpose.msra.mxu0 0.0
    %268 = vmatpush.xpose.msra.mxu0 0.0
    %269 = vmatpush.xpose.msra.mxu0 0.0
    %270 = vmatpush.xpose.msra.mxu0 0.0
    %271 = vmatpush.xpose.msra.mxu0 0.0
    %272 = vmatpush.xpose.msra.mxu0 0.0
    %273 = vmatpush.xpose.msra.mxu0 0.0
    %274 = vmatpush.xpose.msra.mxu0 0.0
    %275 = vmatpush.xpose.msra.mxu0 0.0
    %276 = vmatpush.xpose.msra.mxu0 0.0
    %277 = vmatpush.xpose.msra.mxu0 0.0
    %278 = vmatpush.xpose.msra.mxu0 %v262
    %279 = vmatpush.xpose.msra.mxu0 %v260
    %280 = vmatmul.f32.gmra.mxu0 %v256
    %v281 = vpop.f32.mrf.mxu0
    %v282 = vadd.f32 %v167, %v281
    %283 = vmatmul.f32.gmra.mxu0 %v258
    %v284 = vpop.f32.mrf.mxu0
    %v285 = vadd.f32 %v168, %v284
    %286 = vdwg.mxu0
    %287 = vrot.lane.b32.xlu0 %v209, 120
    %v288 = vpop.permute.xlu0 %287
    %289 = vrot.lane.b32.xlu0 %v211, 120
    %v290 = vpop.permute.xlu0 %289
    %v291 = vsel %vm220, %v209, 0
    %v293 = vsel %vm220, %v211, 0
    %v295 = vsel %vm220, %v288, 0
    %v297 = vsel %vm220, %v290, 0
    %299 = vmatpush.xpose.msra.mxu0 0.0
    %300 = vmatpush.xpose.msra.mxu0 0.0
    %301 = vmatpush.xpose.msra.mxu0 0.0
    %302 = vmatpush.xpose.msra.mxu0 0.0
    %303 = vmatpush.xpose.msra.mxu0 0.0
    %304 = vmatpush.xpose.msra.mxu0 0.0
    %305 = vmatpush.xpose.msra.mxu0 0.0
    %306 = vmatpush.xpose.msra.mxu0 0.0
    %307 = vmatpush.xpose.msra.mxu0 0.0
    %308 = vmatpush.xpose.msra.mxu0 0.0
    %309 = vmatpush.xpose.msra.mxu0 0.0
    %310 = vmatpush.xpose.msra.mxu0 0.0
    %311 = vmatpush.xpose.msra.mxu0 0.0
    %312 = vmatpush.xpose.msra.mxu0 0.0
    %313 = vmatpush.xpose.msra.mxu0 %v297
    %314 = vmatpush.xpose.msra.mxu0 %v295
    %315 = vmatmul.f32.gmra.mxu0 %v291
    %v316 = vpop.f32.mrf.mxu0
    %v317 = vadd.f32 %v167, %v316
    %318 = vmatmul.f32.gmra.mxu0 %v293
    %v319 = vpop.f32.mrf.mxu0
    %v320 = vadd.f32 %v168, %v319
    %321 = vdwg.mxu0
    %322 = vrot.lane.b32.xlu0 %v213, 120
    %v323 = vpop.permute.xlu0 %322
    %324 = vrot.lane.b32.xlu0 %v215, 120
    %v325 = vpop.permute.xlu0 %324
    %v326 = vsel %vm220, %v213, 0
    %v328 = vsel %vm220, %v215, 0
    %v330 = vsel %vm220, %v323, 0
    %v332 = vsel %vm220, %v325, 0
    %334 = vmatpush.xpose.msra.mxu0 0.0
    %335 = vmatpush.xpose.msra.mxu0 0.0
    %336 = vmatpush.xpose.msra.mxu0 0.0
    %337 = vmatpush.xpose.msra.mxu0 0.0
    %338 = vmatpush.xpose.msra.mxu0 0.0
    %339 = vmatpush.xpose.msra.mxu0 0.0
    %340 = vmatpush.xpose.msra.mxu0 0.0
    %341 = vmatpush.xpose.msra.mxu0 0.0
    %342 = vmatpush.xpose.msra.mxu0 0.0
    %343 = vmatpush.xpose.msra.mxu0 0.0
    %344 = vmatpush.xpose.msra.mxu0 0.0
    %345 = vmatpush.xpose.msra.mxu0 0.0
    %346 = vmatpush.xpose.msra.mxu0 0.0
    %347 = vmatpush.xpose.msra.mxu0 0.0
    %348 = vmatpush.xpose.msra.mxu0 %v332
    %349 = vmatpush.xpose.msra.mxu0 %v330
    %350 = vmatmul.f32.gmra.mxu0 %v326
    %v351 = vpop.f32.mrf.mxu0
    %v352 = vadd.f32 %v167, %v351
    %353 = vmatmul.f32.gmra.mxu0 %v328
    %v354 = vpop.f32.mrf.mxu0
    %v355 = vadd.f32 %v168, %v354
    %356 = vdwg.mxu0
    %vm357 = vcmask 130048
    %v358 = vsel %vm357, %v247, -inf
    %359 = vmax.xlane.f32.xlu0 %v358
    %v360 = vpop.xlane.xlu0 %359
    %v361 = vsel %vm357, %v250, -inf
    %362 = vmax.xlane.f32.xlu0 %v361
    %v363 = vpop.xlane.xlu0 %362
    %v364 = vsel %vm357, %v282, -inf
    %365 = vmax.xlane.f32.xlu0 %v364
    %v366 = vpop.xlane.xlu0 %365
    %v367 = vsel %vm357, %v285, -inf
    %368 = vmax.xlane.f32.xlu0 %v367
    %v369 = vpop.xlane.xlu0 %368
    %v370 = vsel %vm357, %v317, -inf
    %371 = vmax.xlane.f32.xlu0 %v370
    %v372 = vpop.xlane.xlu0 %371
    %v373 = vsel %vm357, %v320, -inf
    %374 = vmax.xlane.f32.xlu0 %v373
    %v375 = vpop.xlane.xlu0 %374
    %v376 = vsel %vm357, %v352, -inf
    %377 = vmax.xlane.f32.xlu0 %v376
    %v378 = vpop.xlane.xlu0 %377
    %v379 = vsel %vm357, %v355, -inf
    %380 = vmax.xlane.f32.xlu0 %v379
    %v381 = vpop.xlane.xlu0 %380
    %v382 = vsub.f32 %v247, %v360
    %v383 = vsub.f32 %v250, %v363
    %v384 = vsub.f32 %v282, %v366
    %v385 = vsub.f32 %v285, %v369
    %v386 = vsub.f32 %v317, %v372
    %v387 = vsub.f32 %v320, %v375
    %v388 = vsub.f32 %v352, %v378
    %v389 = vsub.f32 %v355, %v381
    %v390 = vmul.f32 %v382, 1.442695
    %v391 = vpow.pop %v390
    %v392 = vmul.f32 %v383, 1.442695
    %v393 = vpow.pop %v392
    %v394 = vmul.f32 %v384, 1.442695
    %v395 = vpow.pop %v394
    %v396 = vmul.f32 %v385, 1.442695
    %v397 = vpow.pop %v396
    %v398 = vmul.f32 %v386, 1.442695
    %v399 = vpow.pop %v398
    %v400 = vmul.f32 %v387, 1.442695
    %v401 = vpow.pop %v400
    %v402 = vmul.f32 %v388, 1.442695
    %v403 = vpow.pop %v402
    %v404 = vmul.f32 %v389, 1.442695
    %v405 = vpow.pop %v404
    %v406 = vsel %vm357, %v391, 0.0
    %407 = vadd.xlane.f32.xlu0 %v406
    %v408 = vpop.xlane.xlu0 %407
    %v409 = vsel %vm357, %v393, 0.0
    %410 = vadd.xlane.f32.xlu0 %v409
    %v411 = vpop.xlane.xlu0 %410
    %v412 = vsel %vm357, %v395, 0.0
    %413 = vadd.xlane.f32.xlu0 %v412
    %v414 = vpop.xlane.xlu0 %413
    %v415 = vsel %vm357, %v397, 0.0
    %416 = vadd.xlane.f32.xlu0 %v415
    %v417 = vpop.xlane.xlu0 %416
    %v418 = vsel %vm357, %v399, 0.0
    %419 = vadd.xlane.f32.xlu0 %v418
    %v420 = vpop.xlane.xlu0 %419
    %v421 = vsel %vm357, %v401, 0.0
    %422 = vadd.xlane.f32.xlu0 %v421
    %v423 = vpop.xlane.xlu0 %422
    %v424 = vsel %vm357, %v403, 0.0
    %425 = vadd.xlane.f32.xlu0 %v424
    %v426 = vpop.xlane.xlu0 %425
    %v427 = vsel %vm357, %v405, 0.0
    %428 = vadd.xlane.f32.xlu0 %v427
    %v429 = vpop.xlane.xlu0 %428
    %v430 = vrcp.pop %v408
    %v431 = vrcp.pop %v411
    %v432 = vrcp.pop %v414
    %v433 = vrcp.pop %v417
    %v434 = vrcp.pop %v420
    %v435 = vrcp.pop %v423
    %v436 = vrcp.pop %v426
    %v437 = vrcp.pop %v429
    %v438 = vmul.f32 %v408, %v430
    %v439 = vmul.f32 %v411, %v431
    %v440 = vmul.f32 %v414, %v432
    %v441 = vmul.f32 %v417, %v433
    %v442 = vmul.f32 %v420, %v434
    %v443 = vmul.f32 %v423, %v435
    %v444 = vmul.f32 %v426, %v436
    %v445 = vmul.f32 %v429, %v437
    %v446 = vsub.f32 2.0, %v438
    %v447 = vsub.f32 2.0, %v439
    %v448 = vsub.f32 2.0, %v440
    %v449 = vsub.f32 2.0, %v441
    %v450 = vsub.f32 2.0, %v442
    %v451 = vsub.f32 2.0, %v443
    %v452 = vsub.f32 2.0, %v444
    %v453 = vsub.f32 2.0, %v445
    %v454 = vmul.f32 %v430, %v446
    %v455 = vmul.f32 %v431, %v447
    %v456 = vmul.f32 %v432, %v448
    %v457 = vmul.f32 %v433, %v449
    %v458 = vmul.f32 %v434, %v450
    %v459 = vmul.f32 %v435, %v451
    %v460 = vmul.f32 %v436, %v452
    %v461 = vmul.f32 %v437, %v453
    %v462 = vmul.f32 %v391, %v454
    %v463 = vmul.f32 %v393, %v455
    %v464 = vmul.f32 %v395, %v456
    %v465 = vmul.f32 %v397, %v457
    %v466 = vmul.f32 %v399, %v458
    %v467 = vmul.f32 %v401, %v459
    %v468 = vmul.f32 %v403, %v460
    %v469 = vmul.f32 %v405, %v461
    %470 = vrot.lane.b32.xlu0 %v197, 112
    %v471 = vpop.permute.xlu0 %470
    %472 = vrot.lane.b32.xlu0 %v200, 112
    %v473 = vpop.permute.xlu0 %472
    %v477 = vsel %vm357, %v462, 0
    %v480 = vsel %vm357, %v463, 0
    %482 = vmatpush.msra.mxu0 0.0
    %483 = vmatpush.msra.mxu0 0.0
    %484 = vmatpush.msra.mxu0 0.0
    %485 = vmatpush.msra.mxu0 0.0
    %486 = vmatpush.msra.mxu0 0.0
    %487 = vmatpush.msra.mxu0 0.0
    %488 = vmatpush.msra.mxu0 0.0
    %489 = vmatpush.msra.mxu0 0.0
    %490 = vmatpush.msra.mxu0 0.0
    %491 = vmatpush.msra.mxu0 0.0
    %492 = vmatpush.msra.mxu0 0.0
    %493 = vmatpush.msra.mxu0 0.0
    %494 = vmatpush.msra.mxu0 0.0
    %495 = vmatpush.msra.mxu0 0.0
    %496 = vmatpush.msra.mxu0 %v473
    %497 = vmatpush.msra.mxu0 %v471
    %498 = vmatmul.f32.gmra.mxu0 %v477
    %v499 = vpop.f32.mrf.mxu0
    %v500 = vadd.f32 0.0, %v499
    %501 = vmatmul.f32.gmra.mxu0 %v480
    %v502 = vpop.f32.mrf.mxu0
    %v503 = vadd.f32 0.0, %v502
    %504 = vdwg.mxu0
    %505 = vrot.lane.b32.xlu0 %v205, 112
    %v506 = vpop.permute.xlu0 %505
    %507 = vrot.lane.b32.xlu0 %v207, 112
    %v508 = vpop.permute.xlu0 %507
    %v512 = vsel %vm357, %v464, 0
    %v515 = vsel %vm357, %v465, 0
    %517 = vmatpush.msra.mxu0 0.0
    %518 = vmatpush.msra.mxu0 0.0
    %519 = vmatpush.msra.mxu0 0.0
    %520 = vmatpush.msra.mxu0 0.0
    %521 = vmatpush.msra.mxu0 0.0
    %522 = vmatpush.msra.mxu0 0.0
    %523 = vmatpush.msra.mxu0 0.0
    %524 = vmatpush.msra.mxu0 0.0
    %525 = vmatpush.msra.mxu0 0.0
    %526 = vmatpush.msra.mxu0 0.0
    %527 = vmatpush.msra.mxu0 0.0
    %528 = vmatpush.msra.mxu0 0.0
    %529 = vmatpush.msra.mxu0 0.0
    %530 = vmatpush.msra.mxu0 0.0
    %531 = vmatpush.msra.mxu0 %v508
    %532 = vmatpush.msra.mxu0 %v506
    %533 = vmatmul.f32.gmra.mxu0 %v512
    %v534 = vpop.f32.mrf.mxu0
    %v535 = vadd.f32 0.0, %v534
    %536 = vmatmul.f32.gmra.mxu0 %v515
    %v537 = vpop.f32.mrf.mxu0
    %v538 = vadd.f32 0.0, %v537
    %539 = vdwg.mxu0
    %540 = vrot.lane.b32.xlu0 %v209, 112
    %v541 = vpop.permute.xlu0 %540
    %542 = vrot.lane.b32.xlu0 %v211, 112
    %v543 = vpop.permute.xlu0 %542
    %v547 = vsel %vm357, %v466, 0
    %v550 = vsel %vm357, %v467, 0
    %552 = vmatpush.msra.mxu0 0.0
    %553 = vmatpush.msra.mxu0 0.0
    %554 = vmatpush.msra.mxu0 0.0
    %555 = vmatpush.msra.mxu0 0.0
    %556 = vmatpush.msra.mxu0 0.0
    %557 = vmatpush.msra.mxu0 0.0
    %558 = vmatpush.msra.mxu0 0.0
    %559 = vmatpush.msra.mxu0 0.0
    %560 = vmatpush.msra.mxu0 0.0
    %561 = vmatpush.msra.mxu0 0.0
    %562 = vmatpush.msra.mxu0 0.0
    %563 = vmatpush.msra.mxu0 0.0
    %564 = vmatpush.msra.mxu0 0.0
    %565 = vmatpush.msra.mxu0 0.0
    %566 = vmatpush.msra.mxu0 %v543
    %567 = vmatpush.msra.mxu0 %v541
    %568 = vmatmul.f32.gmra.mxu0 %v547
    %v569 = vpop.f32.mrf.mxu0
    %v570 = vadd.f32 0.0, %v569
    %571 = vmatmul.f32.gmra.mxu0 %v550
    %v572 = vpop.f32.mrf.mxu0
    %v573 = vadd.f32 0.0, %v572
    %574 = vdwg.mxu0
    %575 = vrot.lane.b32.xlu0 %v213, 112
    %v576 = vpop.permute.xlu0 %575
    %577 = vrot.lane.b32.xlu0 %v215, 112
    %v578 = vpop.permute.xlu0 %577
    %v582 = vsel %vm357, %v468, 0
    %v585 = vsel %vm357, %v469, 0
    %587 = vmatpush.msra.mxu0 0.0
    %588 = vmatpush.msra.mxu0 0.0
    %589 = vmatpush.msra.mxu0 0.0
    %590 = vmatpush.msra.mxu0 0.0
    %591 = vmatpush.msra.mxu0 0.0
    %592 = vmatpush.msra.mxu0 0.0
    %593 = vmatpush.msra.mxu0 0.0
    %594 = vmatpush.msra.mxu0 0.0
    %595 = vmatpush.msra.mxu0 0.0
    %596 = vmatpush.msra.mxu0 0.0
    %597 = vmatpush.msra.mxu0 0.0
    %598 = vmatpush.msra.mxu0 0.0
    %599 = vmatpush.msra.mxu0 0.0
    %600 = vmatpush.msra.mxu0 0.0
    %601 = vmatpush.msra.mxu0 %v578
    %602 = vmatpush.msra.mxu0 %v576
    %603 = vmatmul.f32.gmra.mxu0 %v582
    %v604 = vpop.f32.mrf.mxu0
    %v605 = vadd.f32 0.0, %v604
    %606 = vmatmul.f32.gmra.mxu0 %v585
    %v607 = vpop.f32.mrf.mxu0
    %v608 = vadd.f32 0.0, %v607
    %609 = vdwg.mxu0
    %612 = vrot.lane.b32.xlu0 %v535, 8
    %v613 = vpop.permute.xlu0 %612
    %614 = vrot.lane.b32.xlu0 %v538, 8
    %v615 = vpop.permute.xlu0 %614
    %620 = vrot.lane.b32.xlu0 %v570, 16
    %v621 = vpop.permute.xlu0 %620
    %622 = vrot.lane.b32.xlu0 %v573, 16
    %v623 = vpop.permute.xlu0 %622
    %628 = vrot.lane.b32.xlu0 %v605, 24
    %v629 = vpop.permute.xlu0 %628
    %630 = vrot.lane.b32.xlu0 %v608, 24
    %v631 = vpop.permute.xlu0 %630
    %v634 = vsel %vm220, %v500, %v613
    %v635 = vsel %vm220, %v503, %v615
    %v636 = vsel %vm357, %v634, %v621
    %v637 = vsel %vm357, %v635, %v623
    %vm638 = vcmask 195584
    %v639 = vsel %vm638, %v636, %v629
    %v640 = vsel %vm638, %v637, %v631
    %v641 = vld [vmem:[%s4] sm:$0xff]
    %v642 = vld [vmem:[%s4 + $0x8] sm:$0xff]
    %v643 = vld [vmem:[%s4 + $0x10] sm:$0xff]
    %v644 = vld [vmem:[%s4 + $0x18] sm:$0xff]
    %v645 = vperm.slane %v42, 2
    %v647 = vsel %vm88, %v639, 0
    %v650 = vsel %vm88, %v640, 0
    %652 = vmatpush.msra.mxu0 0.0
    %653 = vmatpush.msra.mxu0 0.0
    %654 = vmatpush.msra.mxu0 0.0
    %655 = vmatpush.msra.mxu0 0.0
    %656 = vmatpush.msra.mxu0 0.0
    %657 = vmatpush.msra.mxu0 0.0
    %658 = vmatpush.msra.mxu0 0.0
    %659 = vmatpush.msra.mxu0 0.0
    %660 = vmatpush.msra.mxu0 0.0
    %661 = vmatpush.msra.mxu0 0.0
    %662 = vmatpush.msra.mxu0 0.0
    %663 = vmatpush.msra.mxu0 0.0
    %664 = vmatpush.msra.mxu0 %v644
    %665 = vmatpush.msra.mxu0 %v643
    %666 = vmatpush.msra.mxu0 %v642
    %667 = vmatpush.msra.mxu0 %v641
    %668 = vmatmul.f32.gmra.mxu0 %v647
    %v669 = vpop.f32.mrf.mxu0
    %v670 = vadd.f32 %v645, %v669
    %671 = vmatmul.f32.gmra.mxu0 %v650
    %v672 = vpop.f32.mrf.mxu0
    %v673 = vadd.f32 %v645, %v672
    %674 = vdwg.mxu0
    %v675 = vadd.f32 %v670, %v144
    %v676 = vadd.f32 %v673, %v145
    %v677 = vsel %vm88, %v675, 0.0
    %678 = vadd.xlane.f32.xlu0 %v677
    %v679 = vpop.xlane.xlu0 %678
    %v680 = vsel %vm88, %v676, 0.0
    %681 = vadd.xlane.f32.xlu0 %v680
    %v682 = vpop.xlane.xlu0 %681
    %v683 = vmul.f32 %v679, %v101
    %v684 = vmul.f32 %v682, %v101
    %v685 = vsub.f32 %v675, %v683
    %v686 = vsub.f32 %v676, %v684
    %v687 = vmul.f32 %v685, %v685
    %v688 = vmul.f32 %v686, %v686
    %v689 = vsel %vm88, %v687, 0.0
    %690 = vadd.xlane.f32.xlu0 %v689
    %v691 = vpop.xlane.xlu0 %690
    %v692 = vsel %vm88, %v688, 0.0
    %693 = vadd.xlane.f32.xlu0 %v692
    %v694 = vpop.xlane.xlu0 %693
    %v695 = vmul.f32 %v691, %v101
    %v696 = vmul.f32 %v694, %v101
    %v697 = vadd.f32 %v695, 1e-06
    %v698 = vadd.f32 %v696, 1e-06
    %v699 = vrsqrt.pop %v697
    %v700 = vmul.f32 %v699, %v697
    %v701 = vmul.f32 %v700, %v699
    %v702 = vmul.f32 0.5, %v701
    %v703 = vsub.f32 1.5, %v702
    %v704 = vmul.f32 %v699, %v703
    %vm705 = vweird.f32 %v697
    %vm706 = vweird.f32 %v699
    %vm707 = vmor %vm705, %vm706
    %v708 = vsel %vm707, %v699, %v704
    %v709 = vrsqrt.pop %v698
    %v710 = vmul.f32 %v709, %v698
    %v711 = vmul.f32 %v710, %v709
    %v712 = vmul.f32 0.5, %v711
    %v713 = vsub.f32 1.5, %v712
    %v714 = vmul.f32 %v709, %v713
    %vm715 = vweird.f32 %v698
    %vm716 = vweird.f32 %v709
    %vm717 = vmor %vm715, %vm716
    %v718 = vsel %vm717, %v709, %v714
    %v719 = vmul.f32 %v685, %v708
    %v720 = vmul.f32 %v686, %v718
    %v721 = vperm.slane %v42, 3
    %v722 = vmul.f32 %v719, %v721
    %v723 = vmul.f32 %v720, %v721
    %v724 = vperm.slane %v42, 4
    %v725 = vadd.f32 %v722, %v724
    %v726 = vadd.f32 %v723, %v724
    %v727 = vld [vmem:[%s5] sm:$0xff]
    %v728 = vld [vmem:[%s5 + $0x8] sm:$0xff]
    %v729 = vld [vmem:[%s5 + $0x10] sm:$0xff]
    %v730 = vld [vmem:[%s5 + $0x18] sm:$0xff]
    %v731 = vperm.slane %v42, 5
    %v733 = vsel %vm88, %v725, 0
    %v736 = vsel %vm88, %v726, 0
    %738 = vmatpush.msra.mxu0 0.0
    %739 = vmatpush.msra.mxu0 0.0
    %740 = vmatpush.msra.mxu0 0.0
    %741 = vmatpush.msra.mxu0 0.0
    %742 = vmatpush.msra.mxu0 0.0
    %743 = vmatpush.msra.mxu0 0.0
    %744 = vmatpush.msra.mxu0 0.0
    %745 = vmatpush.msra.mxu0 0.0
    %746 = vmatpush.msra.mxu0 0.0
    %747 = vmatpush.msra.mxu0 0.0
    %748 = vmatpush.msra.mxu0 0.0
    %749 = vmatpush.msra.mxu0 0.0
    %750 = vmatpush.msra.mxu0 %v730
    %751 = vmatpush.msra.mxu0 %v729
    %752 = vmatpush.msra.mxu0 %v728
    %753 = vmatpush.msra.mxu0 %v727
    %754 = vmatmul.f32.gmra.mxu0 %v733
    %v755 = vpop.f32.mrf.mxu0
    %v756 = vadd.f32 %v731, %v755
    %757 = vmatmul.f32.gmra.mxu0 %v736
    %v758 = vpop.f32.mrf.mxu0
    %v759 = vadd.f32 %v731, %v758
    %760 = vdwg.mxu0
    %v761 = vmax.f32 %v756, 0.0
    %v762 = vmax.f32 %v759, 0.0
    %v763 = vld [vmem:[%s6] sm:$0xff]
    %v764 = vld [vmem:[%s6 + $0x8] sm:$0xff]
    %v765 = vld [vmem:[%s6 + $0x10] sm:$0xff]
    %v766 = vld [vmem:[%s6 + $0x18] sm:$0xff]
    %v767 = vld [vmem:[%s6 + $0x20] sm:$0xff]
    %v768 = vld [vmem:[%s6 + $0x28] sm:$0xff]
    %v769 = vld [vmem:[%s6 + $0x30] sm:$0xff]
    %v770 = vld [vmem:[%s6 + $0x38] sm:$0xff]
    %v771 = vperm.slane %v42, 6
    %vm772 = vcmask 523264
    %v774 = vsel %vm772, %v761, 0
    %v777 = vsel %vm772, %v762, 0
    %779 = vmatpush.msra.mxu0 0.0
    %780 = vmatpush.msra.mxu0 0.0
    %781 = vmatpush.msra.mxu0 0.0
    %782 = vmatpush.msra.mxu0 0.0
    %783 = vmatpush.msra.mxu0 0.0
    %784 = vmatpush.msra.mxu0 0.0
    %785 = vmatpush.msra.mxu0 0.0
    %786 = vmatpush.msra.mxu0 0.0
    %787 = vmatpush.msra.mxu0 %v770
    %788 = vmatpush.msra.mxu0 %v769
    %789 = vmatpush.msra.mxu0 %v768
    %790 = vmatpush.msra.mxu0 %v767
    %791 = vmatpush.msra.mxu0 %v766
    %792 = vmatpush.msra.mxu0 %v765
    %793 = vmatpush.msra.mxu0 %v764
    %794 = vmatpush.msra.mxu0 %v763
    %795 = vmatmul.f32.gmra.mxu0 %v774
    %v796 = vpop.f32.mrf.mxu0
    %v797 = vadd.f32 %v771, %v796
    %798 = vmatmul.f32.gmra.mxu0 %v777
    %v799 = vpop.f32.mrf.mxu0
    %v800 = vadd.f32 %v771, %v799
    %801 = vdwg.mxu0
    %v802 = vadd.f32 %v797, %v725
    %v803 = vadd.f32 %v800, %v726
    %v804 = vsel %vm88, %v802, 0.0
    %805 = vadd.xlane.f32.xlu0 %v804
    %v806 = vpop.xlane.xlu0 %805
    %v807 = vsel %vm88, %v803, 0.0
    %808 = vadd.xlane.f32.xlu0 %v807
    %v809 = vpop.xlane.xlu0 %808
    %v810 = vmul.f32 %v806, %v101
    %v811 = vmul.f32 %v809, %v101
    %v812 = vsub.f32 %v802, %v810
    %v813 = vsub.f32 %v803, %v811
    %v814 = vmul.f32 %v812, %v812
    %v815 = vmul.f32 %v813, %v813
    %v816 = vsel %vm88, %v814, 0.0
    %817 = vadd.xlane.f32.xlu0 %v816
    %v818 = vpop.xlane.xlu0 %817
    %v819 = vsel %vm88, %v815, 0.0
    %820 = vadd.xlane.f32.xlu0 %v819
    %v821 = vpop.xlane.xlu0 %820
    %v822 = vmul.f32 %v818, %v101
    %v823 = vmul.f32 %v821, %v101
    %v824 = vadd.f32 %v822, 1e-06
    %v825 = vadd.f32 %v823, 1e-06
    %v826 = vrsqrt.pop %v824
    %v827 = vmul.f32 %v826, %v824
    %v828 = vmul.f32 %v827, %v826
    %v829 = vmul.f32 0.5, %v828
    %v830 = vsub.f32 1.5, %v829
    %v831 = vmul.f32 %v826, %v830
    %vm832 = vweird.f32 %v824
    %vm833 = vweird.f32 %v826
    %vm834 = vmor %vm832, %vm833
    %v835 = vsel %vm834, %v826, %v831
    %v836 = vrsqrt.pop %v825
    %v837 = vmul.f32 %v836, %v825
    %v838 = vmul.f32 %v837, %v836
    %v839 = vmul.f32 0.5, %v838
    %v840 = vsub.f32 1.5, %v839
    %v841 = vmul.f32 %v836, %v840
    %vm842 = vweird.f32 %v825
    %vm843 = vweird.f32 %v836
    %vm844 = vmor %vm842, %vm843
    %v845 = vsel %vm844, %v836, %v841
    %v846 = vmul.f32 %v812, %v835
    %v847 = vmul.f32 %v813, %v845
    %v848 = vperm.slane %v42, 7
    %v849 = vmul.f32 %v846, %v848
    %v850 = vmul.f32 %v847, %v848
    %v851 = vperm.slane %v43, 0
    %v852 = vadd.f32 %v849, %v851
    %v853 = vadd.f32 %v850, %v851
    %s854 = scalar_lea.vmem %s3, 32
    %v855 = vld [vmem:[%s854] sm:$0xff]
    %v856 = vld [vmem:[%s854 + $0x8] sm:$0xff]
    %v857 = vld [vmem:[%s854 + $0x10] sm:$0xff]
    %v858 = vld [vmem:[%s854 + $0x18] sm:$0xff]
    %v860 = vsel %vm88, %v852, 0
    %v863 = vsel %vm88, %v853, 0
    %865 = vmatpush.msra.mxu0 0.0
    %866 = vmatpush.msra.mxu0 0.0
    %867 = vmatpush.msra.mxu0 0.0
    %868 = vmatpush.msra.mxu0 0.0
    %869 = vmatpush.msra.mxu0 0.0
    %870 = vmatpush.msra.mxu0 0.0
    %871 = vmatpush.msra.mxu0 0.0
    %872 = vmatpush.msra.mxu0 0.0
    %873 = vmatpush.msra.mxu0 0.0
    %874 = vmatpush.msra.mxu0 0.0
    %875 = vmatpush.msra.mxu0 0.0
    %876 = vmatpush.msra.mxu0 0.0
    %877 = vmatpush.msra.mxu0 %v858
    %878 = vmatpush.msra.mxu0 %v857
    %879 = vmatpush.msra.mxu0 %v856
    %880 = vmatpush.msra.mxu0 %v855
    %881 = vmatmul.f32.gmra.mxu0 %v860
    %v882 = vpop.f32.mrf.mxu0
    %v883 = vadd.f32 0.0, %v882
    %884 = vmatmul.f32.gmra.mxu0 %v863
    %v885 = vpop.f32.mrf.mxu0
    %v886 = vadd.f32 0.0, %v885
    %887 = vdwg.mxu0
    %890 = vrot.lane.b32.xlu0 %v883, 104
    %v891 = vpop.permute.xlu0 %890
    %892 = vrot.lane.b32.xlu0 %v886, 104
    %v893 = vpop.permute.xlu0 %892
    %894 = vrot.lane.b32.xlu0 %v883, 80
    %v895 = vpop.permute.xlu0 %894
    %896 = vrot.lane.b32.xlu0 %v886, 80
    %v897 = vpop.permute.xlu0 %896
    %898 = vrot.lane.b32.xlu0 %v883, 56
    %v899 = vpop.permute.xlu0 %898
    %900 = vrot.lane.b32.xlu0 %v886, 56
    %v901 = vpop.permute.xlu0 %900
    %902 = vrot.lane.b32.xlu0 %v883, 120
    %v903 = vpop.permute.xlu0 %902
    %904 = vrot.lane.b32.xlu0 %v886, 120
    %v905 = vpop.permute.xlu0 %904
    %v906 = vsel %vm220, %v883, 0
    %v908 = vsel %vm220, %v886, 0
    %v910 = vsel %vm220, %v903, 0
    %v912 = vsel %vm220, %v905, 0
    %914 = vmatpush.xpose.msra.mxu0 0.0
    %915 = vmatpush.xpose.msra.mxu0 0.0
    %916 = vmatpush.xpose.msra.mxu0 0.0
    %917 = vmatpush.xpose.msra.mxu0 0.0
    %918 = vmatpush.xpose.msra.mxu0 0.0
    %919 = vmatpush.xpose.msra.mxu0 0.0
    %920 = vmatpush.xpose.msra.mxu0 0.0
    %921 = vmatpush.xpose.msra.mxu0 0.0
    %922 = vmatpush.xpose.msra.mxu0 0.0
    %923 = vmatpush.xpose.msra.mxu0 0.0
    %924 = vmatpush.xpose.msra.mxu0 0.0
    %925 = vmatpush.xpose.msra.mxu0 0.0
    %926 = vmatpush.xpose.msra.mxu0 0.0
    %927 = vmatpush.xpose.msra.mxu0 0.0
    %928 = vmatpush.xpose.msra.mxu0 %v912
    %929 = vmatpush.xpose.msra.mxu0 %v910
    %930 = vmatmul.f32.gmra.mxu0 %v906
    %v931 = vpop.f32.mrf.mxu0
    %v932 = vadd.f32 %v167, %v931
    %933 = vmatmul.f32.gmra.mxu0 %v908
    %v934 = vpop.f32.mrf.mxu0
    %v935 = vadd.f32 %v168, %v934
    %936 = vdwg.mxu0
    %937 = vrot.lane.b32.xlu0 %v891, 120
    %v938 = vpop.permute.xlu0 %937
    %939 = vrot.lane.b32.xlu0 %v893, 120
    %v940 = vpop.permute.xlu0 %939
    %v941 = vsel %vm220, %v891, 0
    %v943 = vsel %vm220, %v893, 0
    %v945 = vsel %vm220, %v938, 0
    %v947 = vsel %vm220, %v940, 0
    %949 = vmatpush.xpose.msra.mxu0 0.0
    %950 = vmatpush.xpose.msra.mxu0 0.0
    %951 = vmatpush.xpose.msra.mxu0 0.0
    %952 = vmatpush.xpose.msra.mxu0 0.0
    %953 = vmatpush.xpose.msra.mxu0 0.0
    %954 = vmatpush.xpose.msra.mxu0 0.0
    %955 = vmatpush.xpose.msra.mxu0 0.0
    %956 = vmatpush.xpose.msra.mxu0 0.0
    %957 = vmatpush.xpose.msra.mxu0 0.0
    %958 = vmatpush.xpose.msra.mxu0 0.0
    %959 = vmatpush.xpose.msra.mxu0 0.0
    %960 = vmatpush.xpose.msra.mxu0 0.0
    %961 = vmatpush.xpose.msra.mxu0 0.0
    %962 = vmatpush.xpose.msra.mxu0 0.0
    %963 = vmatpush.xpose.msra.mxu0 %v947
    %964 = vmatpush.xpose.msra.mxu0 %v945
    %965 = vmatmul.f32.gmra.mxu0 %v941
    %v966 = vpop.f32.mrf.mxu0
    %v967 = vadd.f32 %v167, %v966
    %968 = vmatmul.f32.gmra.mxu0 %v943
    %v969 = vpop.f32.mrf.mxu0
    %v970 = vadd.f32 %v168, %v969
    %971 = vdwg.mxu0
    %972 = vrot.lane.b32.xlu0 %v895, 120
    %v973 = vpop.permute.xlu0 %972
    %974 = vrot.lane.b32.xlu0 %v897, 120
    %v975 = vpop.permute.xlu0 %974
    %v976 = vsel %vm220, %v895, 0
    %v978 = vsel %vm220, %v897, 0
    %v980 = vsel %vm220, %v973, 0
    %v982 = vsel %vm220, %v975, 0
    %984 = vmatpush.xpose.msra.mxu0 0.0
    %985 = vmatpush.xpose.msra.mxu0 0.0
    %986 = vmatpush.xpose.msra.mxu0 0.0
    %987 = vmatpush.xpose.msra.mxu0 0.0
    %988 = vmatpush.xpose.msra.mxu0 0.0
    %989 = vmatpush.xpose.msra.mxu0 0.0
    %990 = vmatpush.xpose.msra.mxu0 0.0
    %991 = vmatpush.xpose.msra.mxu0 0.0
    %992 = vmatpush.xpose.msra.mxu0 0.0
    %993 = vmatpush.xpose.msra.mxu0 0.0
    %994 = vmatpush.xpose.msra.mxu0 0.0
    %995 = vmatpush.xpose.msra.mxu0 0.0
    %996 = vmatpush.xpose.msra.mxu0 0.0
    %997 = vmatpush.xpose.msra.mxu0 0.0
    %998 = vmatpush.xpose.msra.mxu0 %v982
    %999 = vmatpush.xpose.msra.mxu0 %v980
    %1000 = vmatmul.f32.gmra.mxu0 %v976
    %v1001 = vpop.f32.mrf.mxu0
    %v1002 = vadd.f32 %v167, %v1001
    %1003 = vmatmul.f32.gmra.mxu0 %v978
    %v1004 = vpop.f32.mrf.mxu0
    %v1005 = vadd.f32 %v168, %v1004
    %1006 = vdwg.mxu0
    %1007 = vrot.lane.b32.xlu0 %v899, 120
    %v1008 = vpop.permute.xlu0 %1007
    %1009 = vrot.lane.b32.xlu0 %v901, 120
    %v1010 = vpop.permute.xlu0 %1009
    %v1011 = vsel %vm220, %v899, 0
    %v1013 = vsel %vm220, %v901, 0
    %v1015 = vsel %vm220, %v1008, 0
    %v1017 = vsel %vm220, %v1010, 0
    %1019 = vmatpush.xpose.msra.mxu0 0.0
    %1020 = vmatpush.xpose.msra.mxu0 0.0
    %1021 = vmatpush.xpose.msra.mxu0 0.0
    %1022 = vmatpush.xpose.msra.mxu0 0.0
    %1023 = vmatpush.xpose.msra.mxu0 0.0
    %1024 = vmatpush.xpose.msra.mxu0 0.0
    %1025 = vmatpush.xpose.msra.mxu0 0.0
    %1026 = vmatpush.xpose.msra.mxu0 0.0
    %1027 = vmatpush.xpose.msra.mxu0 0.0
    %1028 = vmatpush.xpose.msra.mxu0 0.0
    %1029 = vmatpush.xpose.msra.mxu0 0.0
    %1030 = vmatpush.xpose.msra.mxu0 0.0
    %1031 = vmatpush.xpose.msra.mxu0 0.0
    %1032 = vmatpush.xpose.msra.mxu0 0.0
    %1033 = vmatpush.xpose.msra.mxu0 %v1017
    %1034 = vmatpush.xpose.msra.mxu0 %v1015
    %1035 = vmatmul.f32.gmra.mxu0 %v1011
    %v1036 = vpop.f32.mrf.mxu0
    %v1037 = vadd.f32 %v167, %v1036
    %1038 = vmatmul.f32.gmra.mxu0 %v1013
    %v1039 = vpop.f32.mrf.mxu0
    %v1040 = vadd.f32 %v168, %v1039
    %1041 = vdwg.mxu0
    %v1042 = vsel %vm357, %v932, -inf
    %1043 = vmax.xlane.f32.xlu0 %v1042
    %v1044 = vpop.xlane.xlu0 %1043
    %v1045 = vsel %vm357, %v935, -inf
    %1046 = vmax.xlane.f32.xlu0 %v1045
    %v1047 = vpop.xlane.xlu0 %1046
    %v1048 = vsel %vm357, %v967, -inf
    %1049 = vmax.xlane.f32.xlu0 %v1048
    %v1050 = vpop.xlane.xlu0 %1049
    %v1051 = vsel %vm357, %v970, -inf
    %1052 = vmax.xlane.f32.xlu0 %v1051
    %v1053 = vpop.xlane.xlu0 %1052
    %v1054 = vsel %vm357, %v1002, -inf
    %1055 = vmax.xlane.f32.xlu0 %v1054
    %v1056 = vpop.xlane.xlu0 %1055
    %v1057 = vsel %vm357, %v1005, -inf
    %1058 = vmax.xlane.f32.xlu0 %v1057
    %v1059 = vpop.xlane.xlu0 %1058
    %v1060 = vsel %vm357, %v1037, -inf
    %1061 = vmax.xlane.f32.xlu0 %v1060
    %v1062 = vpop.xlane.xlu0 %1061
    %v1063 = vsel %vm357, %v1040, -inf
    %1064 = vmax.xlane.f32.xlu0 %v1063
    %v1065 = vpop.xlane.xlu0 %1064
    %v1066 = vsub.f32 %v932, %v1044
    %v1067 = vsub.f32 %v935, %v1047
    %v1068 = vsub.f32 %v967, %v1050
    %v1069 = vsub.f32 %v970, %v1053
    %v1070 = vsub.f32 %v1002, %v1056
    %v1071 = vsub.f32 %v1005, %v1059
    %v1072 = vsub.f32 %v1037, %v1062
    %v1073 = vsub.f32 %v1040, %v1065
    %v1074 = vmul.f32 %v1066, 1.442695
    %v1075 = vpow.pop %v1074
    %v1076 = vmul.f32 %v1067, 1.442695
    %v1077 = vpow.pop %v1076
    %v1078 = vmul.f32 %v1068, 1.442695
    %v1079 = vpow.pop %v1078
    %v1080 = vmul.f32 %v1069, 1.442695
    %v1081 = vpow.pop %v1080
    %v1082 = vmul.f32 %v1070, 1.442695
    %v1083 = vpow.pop %v1082
    %v1084 = vmul.f32 %v1071, 1.442695
    %v1085 = vpow.pop %v1084
    %v1086 = vmul.f32 %v1072, 1.442695
    %v1087 = vpow.pop %v1086
    %v1088 = vmul.f32 %v1073, 1.442695
    %v1089 = vpow.pop %v1088
    %v1090 = vsel %vm357, %v1075, 0.0
    %1091 = vadd.xlane.f32.xlu0 %v1090
    %v1092 = vpop.xlane.xlu0 %1091
    %v1093 = vsel %vm357, %v1077, 0.0
    %1094 = vadd.xlane.f32.xlu0 %v1093
    %v1095 = vpop.xlane.xlu0 %1094
    %v1096 = vsel %vm357, %v1079, 0.0
    %1097 = vadd.xlane.f32.xlu0 %v1096
    %v1098 = vpop.xlane.xlu0 %1097
    %v1099 = vsel %vm357, %v1081, 0.0
    %1100 = vadd.xlane.f32.xlu0 %v1099
    %v1101 = vpop.xlane.xlu0 %1100
    %v1102 = vsel %vm357, %v1083, 0.0
    %1103 = vadd.xlane.f32.xlu0 %v1102
    %v1104 = vpop.xlane.xlu0 %1103
    %v1105 = vsel %vm357, %v1085, 0.0
    %1106 = vadd.xlane.f32.xlu0 %v1105
    %v1107 = vpop.xlane.xlu0 %1106
    %v1108 = vsel %vm357, %v1087, 0.0
    %1109 = vadd.xlane.f32.xlu0 %v1108
    %v1110 = vpop.xlane.xlu0 %1109
    %v1111 = vsel %vm357, %v1089, 0.0
    %1112 = vadd.xlane.f32.xlu0 %v1111
    %v1113 = vpop.xlane.xlu0 %1112
    %v1114 = vrcp.pop %v1092
    %v1115 = vrcp.pop %v1095
    %v1116 = vrcp.pop %v1098
    %v1117 = vrcp.pop %v1101
    %v1118 = vrcp.pop %v1104
    %v1119 = vrcp.pop %v1107
    %v1120 = vrcp.pop %v1110
    %v1121 = vrcp.pop %v1113
    %v1122 = vmul.f32 %v1092, %v1114
    %v1123 = vmul.f32 %v1095, %v1115
    %v1124 = vmul.f32 %v1098, %v1116
    %v1125 = vmul.f32 %v1101, %v1117
    %v1126 = vmul.f32 %v1104, %v1118
    %v1127 = vmul.f32 %v1107, %v1119
    %v1128 = vmul.f32 %v1110, %v1120
    %v1129 = vmul.f32 %v1113, %v1121
    %v1130 = vsub.f32 2.0, %v1122
    %v1131 = vsub.f32 2.0, %v1123
    %v1132 = vsub.f32 2.0, %v1124
    %v1133 = vsub.f32 2.0, %v1125
    %v1134 = vsub.f32 2.0, %v1126
    %v1135 = vsub.f32 2.0, %v1127
    %v1136 = vsub.f32 2.0, %v1128
    %v1137 = vsub.f32 2.0, %v1129
    %v1138 = vmul.f32 %v1114, %v1130
    %v1139 = vmul.f32 %v1115, %v1131
    %v1140 = vmul.f32 %v1116, %v1132
    %v1141 = vmul.f32 %v1117, %v1133
    %v1142 = vmul.f32 %v1118, %v1134
    %v1143 = vmul.f32 %v1119, %v1135
    %v1144 = vmul.f32 %v1120, %v1136
    %v1145 = vmul.f32 %v1121, %v1137
    %v1146 = vmul.f32 %v1075, %v1138
    %v1147 = vmul.f32 %v1077, %v1139
    %v1148 = vmul.f32 %v1079, %v1140
    %v1149 = vmul.f32 %v1081, %v1141
    %v1150 = vmul.f32 %v1083, %v1142
    %v1151 = vmul.f32 %v1085, %v1143
    %v1152 = vmul.f32 %v1087, %v1144
    %v1153 = vmul.f32 %v1089, %v1145
    %1154 = vrot.lane.b32.xlu0 %v883, 112
    %v1155 = vpop.permute.xlu0 %1154
    %1156 = vrot.lane.b32.xlu0 %v886, 112
    %v1157 = vpop.permute.xlu0 %1156
    %v1161 = vsel %vm357, %v1146, 0
    %v1164 = vsel %vm357, %v1147, 0
    %1166 = vmatpush.msra.mxu0 0.0
    %1167 = vmatpush.msra.mxu0 0.0
    %1168 = vmatpush.msra.mxu0 0.0
    %1169 = vmatpush.msra.mxu0 0.0
    %1170 = vmatpush.msra.mxu0 0.0
    %1171 = vmatpush.msra.mxu0 0.0
    %1172 = vmatpush.msra.mxu0 0.0
    %1173 = vmatpush.msra.mxu0 0.0
    %1174 = vmatpush.msra.mxu0 0.0
    %1175 = vmatpush.msra.mxu0 0.0
    %1176 = vmatpush.msra.mxu0 0.0
    %1177 = vmatpush.msra.mxu0 0.0
    %1178 = vmatpush.msra.mxu0 0.0
    %1179 = vmatpush.msra.mxu0 0.0
    %1180 = vmatpush.msra.mxu0 %v1157
    %1181 = vmatpush.msra.mxu0 %v1155
    %1182 = vmatmul.f32.gmra.mxu0 %v1161
    %v1183 = vpop.f32.mrf.mxu0
    %v1184 = vadd.f32 0.0, %v1183
    %1185 = vmatmul.f32.gmra.mxu0 %v1164
    %v1186 = vpop.f32.mrf.mxu0
    %v1187 = vadd.f32 0.0, %v1186
    %1188 = vdwg.mxu0
    %1189 = vrot.lane.b32.xlu0 %v891, 112
    %v1190 = vpop.permute.xlu0 %1189
    %1191 = vrot.lane.b32.xlu0 %v893, 112
    %v1192 = vpop.permute.xlu0 %1191
    %v1196 = vsel %vm357, %v1148, 0
    %v1199 = vsel %vm357, %v1149, 0
    %1201 = vmatpush.msra.mxu0 0.0
    %1202 = vmatpush.msra.mxu0 0.0
    %1203 = vmatpush.msra.mxu0 0.0
    %1204 = vmatpush.msra.mxu0 0.0
    %1205 = vmatpush.msra.mxu0 0.0
    %1206 = vmatpush.msra.mxu0 0.0
    %1207 = vmatpush.msra.mxu0 0.0
    %1208 = vmatpush.msra.mxu0 0.0
    %1209 = vmatpush.msra.mxu0 0.0
    %1210 = vmatpush.msra.mxu0 0.0
    %1211 = vmatpush.msra.mxu0 0.0
    %1212 = vmatpush.msra.mxu0 0.0
    %1213 = vmatpush.msra.mxu0 0.0
    %1214 = vmatpush.msra.mxu0 0.0
    %1215 = vmatpush.msra.mxu0 %v1192
    %1216 = vmatpush.msra.mxu0 %v1190
    %1217 = vmatmul.f32.gmra.mxu0 %v1196
    %v1218 = vpop.f32.mrf.mxu0
    %v1219 = vadd.f32 0.0, %v1218
    %1220 = vmatmul.f32.gmra.mxu0 %v1199
    %v1221 = vpop.f32.mrf.mxu0
    %v1222 = vadd.f32 0.0, %v1221
    %1223 = vdwg.mxu0
    %1224 = vrot.lane.b32.xlu0 %v895, 112
    %v1225 = vpop.permute.xlu0 %1224
    %1226 = vrot.lane.b32.xlu0 %v897, 112
    %v1227 = vpop.permute.xlu0 %1226
    %v1231 = vsel %vm357, %v1150, 0
    %v1234 = vsel %vm357, %v1151, 0
    %1236 = vmatpush.msra.mxu0 0.0
    %1237 = vmatpush.msra.mxu0 0.0
    %1238 = vmatpush.msra.mxu0 0.0
    %1239 = vmatpush.msra.mxu0 0.0
    %1240 = vmatpush.msra.mxu0 0.0
    %1241 = vmatpush.msra.mxu0 0.0
    %1242 = vmatpush.msra.mxu0 0.0
    %1243 = vmatpush.msra.mxu0 0.0
    %1244 = vmatpush.msra.mxu0 0.0
    %1245 = vmatpush.msra.mxu0 0.0
    %1246 = vmatpush.msra.mxu0 0.0
    %1247 = vmatpush.msra.mxu0 0.0
    %1248 = vmatpush.msra.mxu0 0.0
    %1249 = vmatpush.msra.mxu0 0.0
    %1250 = vmatpush.msra.mxu0 %v1227
    %1251 = vmatpush.msra.mxu0 %v1225
    %1252 = vmatmul.f32.gmra.mxu0 %v1231
    %v1253 = vpop.f32.mrf.mxu0
    %v1254 = vadd.f32 0.0, %v1253
    %1255 = vmatmul.f32.gmra.mxu0 %v1234
    %v1256 = vpop.f32.mrf.mxu0
    %v1257 = vadd.f32 0.0, %v1256
    %1258 = vdwg.mxu0
    %1259 = vrot.lane.b32.xlu0 %v899, 112
    %v1260 = vpop.permute.xlu0 %1259
    %1261 = vrot.lane.b32.xlu0 %v901, 112
    %v1262 = vpop.permute.xlu0 %1261
    %v1266 = vsel %vm357, %v1152, 0
    %v1269 = vsel %vm357, %v1153, 0
    %1271 = vmatpush.msra.mxu0 0.0
    %1272 = vmatpush.msra.mxu0 0.0
    %1273 = vmatpush.msra.mxu0 0.0
    %1274 = vmatpush.msra.mxu0 0.0
    %1275 = vmatpush.msra.mxu0 0.0
    %1276 = vmatpush.msra.mxu0 0.0
    %1277 = vmatpush.msra.mxu0 0.0
    %1278 = vmatpush.msra.mxu0 0.0
    %1279 = vmatpush.msra.mxu0 0.0
    %1280 = vmatpush.msra.mxu0 0.0
    %1281 = vmatpush.msra.mxu0 0.0
    %1282 = vmatpush.msra.mxu0 0.0
    %1283 = vmatpush.msra.mxu0 0.0
    %1284 = vmatpush.msra.mxu0 0.0
    %1285 = vmatpush.msra.mxu0 %v1262
    %1286 = vmatpush.msra.mxu0 %v1260
    %1287 = vmatmul.f32.gmra.mxu0 %v1266
    %v1288 = vpop.f32.mrf.mxu0
    %v1289 = vadd.f32 0.0, %v1288
    %1290 = vmatmul.f32.gmra.mxu0 %v1269
    %v1291 = vpop.f32.mrf.mxu0
    %v1292 = vadd.f32 0.0, %v1291
    %1293 = vdwg.mxu0
    %1296 = vrot.lane.b32.xlu0 %v1219, 8
    %v1297 = vpop.permute.xlu0 %1296
    %1298 = vrot.lane.b32.xlu0 %v1222, 8
    %v1299 = vpop.permute.xlu0 %1298
    %1304 = vrot.lane.b32.xlu0 %v1254, 16
    %v1305 = vpop.permute.xlu0 %1304
    %1306 = vrot.lane.b32.xlu0 %v1257, 16
    %v1307 = vpop.permute.xlu0 %1306
    %1312 = vrot.lane.b32.xlu0 %v1289, 24
    %v1313 = vpop.permute.xlu0 %1312
    %1314 = vrot.lane.b32.xlu0 %v1292, 24
    %v1315 = vpop.permute.xlu0 %1314
    %v1318 = vsel %vm220, %v1184, %v1297
    %v1319 = vsel %vm220, %v1187, %v1299
    %v1320 = vsel %vm357, %v1318, %v1305
    %v1321 = vsel %vm357, %v1319, %v1307
    %v1322 = vsel %vm638, %v1320, %v1313
    %v1323 = vsel %vm638, %v1321, %v1315
    %s1324 = scalar_lea.vmem %s4, 32
    %v1325 = vld [vmem:[%s1324] sm:$0xff]
    %v1326 = vld [vmem:[%s1324 + $0x8] sm:$0xff]
    %v1327 = vld [vmem:[%s1324 + $0x10] sm:$0xff]
    %v1328 = vld [vmem:[%s1324 + $0x18] sm:$0xff]
    %v1329 = vperm.slane %v43, 1
    %v1331 = vsel %vm88, %v1322, 0
    %v1334 = vsel %vm88, %v1323, 0
    %1336 = vmatpush.msra.mxu0 0.0
    %1337 = vmatpush.msra.mxu0 0.0
    %1338 = vmatpush.msra.mxu0 0.0
    %1339 = vmatpush.msra.mxu0 0.0
    %1340 = vmatpush.msra.mxu0 0.0
    %1341 = vmatpush.msra.mxu0 0.0
    %1342 = vmatpush.msra.mxu0 0.0
    %1343 = vmatpush.msra.mxu0 0.0
    %1344 = vmatpush.msra.mxu0 0.0
    %1345 = vmatpush.msra.mxu0 0.0
    %1346 = vmatpush.msra.mxu0 0.0
    %1347 = vmatpush.msra.mxu0 0.0
    %1348 = vmatpush.msra.mxu0 %v1328
    %1349 = vmatpush.msra.mxu0 %v1327
    %1350 = vmatpush.msra.mxu0 %v1326
    %1351 = vmatpush.msra.mxu0 %v1325
    %1352 = vmatmul.f32.gmra.mxu0 %v1331
    %v1353 = vpop.f32.mrf.mxu0
    %v1354 = vadd.f32 %v1329, %v1353
    %1355 = vmatmul.f32.gmra.mxu0 %v1334
    %v1356 = vpop.f32.mrf.mxu0
    %v1357 = vadd.f32 %v1329, %v1356
    %1358 = vdwg.mxu0
    %v1359 = vadd.f32 %v1354, %v852
    %v1360 = vadd.f32 %v1357, %v853
    %v1361 = vsel %vm88, %v1359, 0.0
    %1362 = vadd.xlane.f32.xlu0 %v1361
    %v1363 = vpop.xlane.xlu0 %1362
    %v1364 = vsel %vm88, %v1360, 0.0
    %1365 = vadd.xlane.f32.xlu0 %v1364
    %v1366 = vpop.xlane.xlu0 %1365
    %v1367 = vmul.f32 %v1363, %v101
    %v1368 = vmul.f32 %v1366, %v101
    %v1369 = vsub.f32 %v1359, %v1367
    %v1370 = vsub.f32 %v1360, %v1368
    %v1371 = vmul.f32 %v1369, %v1369
    %v1372 = vmul.f32 %v1370, %v1370
    %v1373 = vsel %vm88, %v1371, 0.0
    %1374 = vadd.xlane.f32.xlu0 %v1373
    %v1375 = vpop.xlane.xlu0 %1374
    %v1376 = vsel %vm88, %v1372, 0.0
    %1377 = vadd.xlane.f32.xlu0 %v1376
    %v1378 = vpop.xlane.xlu0 %1377
    %v1379 = vmul.f32 %v1375, %v101
    %v1380 = vmul.f32 %v1378, %v101
    %v1381 = vadd.f32 %v1379, 1e-06
    %v1382 = vadd.f32 %v1380, 1e-06
    %v1383 = vrsqrt.pop %v1381
    %v1384 = vmul.f32 %v1383, %v1381
    %v1385 = vmul.f32 %v1384, %v1383
    %v1386 = vmul.f32 0.5, %v1385
    %v1387 = vsub.f32 1.5, %v1386
    %v1388 = vmul.f32 %v1383, %v1387
    %vm1389 = vweird.f32 %v1381
    %vm1390 = vweird.f32 %v1383
    %vm1391 = vmor %vm1389, %vm1390
    %v1392 = vsel %vm1391, %v1383, %v1388
    %v1393 = vrsqrt.pop %v1382
    %v1394 = vmul.f32 %v1393, %v1382
    %v1395 = vmul.f32 %v1394, %v1393
    %v1396 = vmul.f32 0.5, %v1395
    %v1397 = vsub.f32 1.5, %v1396
    %v1398 = vmul.f32 %v1393, %v1397
    %vm1399 = vweird.f32 %v1382
    %vm1400 = vweird.f32 %v1393
    %vm1401 = vmor %vm1399, %vm1400
    %v1402 = vsel %vm1401, %v1393, %v1398
    %v1403 = vmul.f32 %v1369, %v1392
    %v1404 = vmul.f32 %v1370, %v1402
    %v1405 = vperm.slane %v43, 2
    %v1406 = vmul.f32 %v1403, %v1405
    %v1407 = vmul.f32 %v1404, %v1405
    %v1408 = vperm.slane %v43, 3
    %v1409 = vadd.f32 %v1406, %v1408
    %v1410 = vadd.f32 %v1407, %v1408
    %s1411 = scalar_lea.vmem %s5, 32
    %v1412 = vld [vmem:[%s1411] sm:$0xff]
    %v1413 = vld [vmem:[%s1411 + $0x8] sm:$0xff]
    %v1414 = vld [vmem:[%s1411 + $0x10] sm:$0xff]
    %v1415 = vld [vmem:[%s1411 + $0x18] sm:$0xff]
    %v1416 = vperm.slane %v43, 4
    %v1418 = vsel %vm88, %v1409, 0
    %v1421 = vsel %vm88, %v1410, 0
    %1423 = vmatpush.msra.mxu0 0.0
    %1424 = vmatpush.msra.mxu0 0.0
    %1425 = vmatpush.msra.mxu0 0.0
    %1426 = vmatpush.msra.mxu0 0.0
    %1427 = vmatpush.msra.mxu0 0.0
    %1428 = vmatpush.msra.mxu0 0.0
    %1429 = vmatpush.msra.mxu0 0.0
    %1430 = vmatpush.msra.mxu0 0.0
    %1431 = vmatpush.msra.mxu0 0.0
    %1432 = vmatpush.msra.mxu0 0.0
    %1433 = vmatpush.msra.mxu0 0.0
    %1434 = vmatpush.msra.mxu0 0.0
    %1435 = vmatpush.msra.mxu0 %v1415
    %1436 = vmatpush.msra.mxu0 %v1414
    %1437 = vmatpush.msra.mxu0 %v1413
    %1438 = vmatpush.msra.mxu0 %v1412
    %1439 = vmatmul.f32.gmra.mxu0 %v1418
    %v1440 = vpop.f32.mrf.mxu0
    %v1441 = vadd.f32 %v1416, %v1440
    %1442 = vmatmul.f32.gmra.mxu0 %v1421
    %v1443 = vpop.f32.mrf.mxu0
    %v1444 = vadd.f32 %v1416, %v1443
    %1445 = vdwg.mxu0
    %v1446 = vmax.f32 %v1441, 0.0
    %v1447 = vmax.f32 %v1444, 0.0
    %s1448 = scalar_lea.vmem %s6, 64
    %v1449 = vld [vmem:[%s1448] sm:$0xff]
    %v1450 = vld [vmem:[%s1448 + $0x8] sm:$0xff]
    %v1451 = vld [vmem:[%s1448 + $0x10] sm:$0xff]
    %v1452 = vld [vmem:[%s1448 + $0x18] sm:$0xff]
    %v1453 = vld [vmem:[%s1448 + $0x20] sm:$0xff]
    %v1454 = vld [vmem:[%s1448 + $0x28] sm:$0xff]
    %v1455 = vld [vmem:[%s1448 + $0x30] sm:$0xff]
    %v1456 = vld [vmem:[%s1448 + $0x38] sm:$0xff]
    %v1457 = vperm.slane %v43, 5
    %v1459 = vsel %vm772, %v1446, 0
    %v1462 = vsel %vm772, %v1447, 0
    %1464 = vmatpush.msra.mxu0 0.0
    %1465 = vmatpush.msra.mxu0 0.0
    %1466 = vmatpush.msra.mxu0 0.0
    %1467 = vmatpush.msra.mxu0 0.0
    %1468 = vmatpush.msra.mxu0 0.0
    %1469 = vmatpush.msra.mxu0 0.0
    %1470 = vmatpush.msra.mxu0 0.0
    %1471 = vmatpush.msra.mxu0 0.0
    %1472 = vmatpush.msra.mxu0 %v1456
    %1473 = vmatpush.msra.mxu0 %v1455
    %1474 = vmatpush.msra.mxu0 %v1454
    %1475 = vmatpush.msra.mxu0 %v1453
    %1476 = vmatpush.msra.mxu0 %v1452
    %1477 = vmatpush.msra.mxu0 %v1451
    %1478 = vmatpush.msra.mxu0 %v1450
    %1479 = vmatpush.msra.mxu0 %v1449
    %1480 = vmatmul.f32.gmra.mxu0 %v1459
    %v1481 = vpop.f32.mrf.mxu0
    %v1482 = vadd.f32 %v1457, %v1481
    %1483 = vmatmul.f32.gmra.mxu0 %v1462
    %v1484 = vpop.f32.mrf.mxu0
    %v1485 = vadd.f32 %v1457, %v1484
    %1486 = vdwg.mxu0
    %v1487 = vadd.f32 %v1482, %v1409
    %v1488 = vadd.f32 %v1485, %v1410
    %v1489 = vsel %vm88, %v1487, 0.0
    %1490 = vadd.xlane.f32.xlu0 %v1489
    %v1491 = vpop.xlane.xlu0 %1490
    %v1492 = vsel %vm88, %v1488, 0.0
    %1493 = vadd.xlane.f32.xlu0 %v1492
    %v1494 = vpop.xlane.xlu0 %1493
    %v1495 = vmul.f32 %v1491, %v101
    %v1496 = vmul.f32 %v1494, %v101
    %v1497 = vsub.f32 %v1487, %v1495
    %v1498 = vsub.f32 %v1488, %v1496
    %v1499 = vmul.f32 %v1497, %v1497
    %v1500 = vmul.f32 %v1498, %v1498
    %v1501 = vsel %vm88, %v1499, 0.0
    %1502 = vadd.xlane.f32.xlu0 %v1501
    %v1503 = vpop.xlane.xlu0 %1502
    %v1504 = vsel %vm88, %v1500, 0.0
    %1505 = vadd.xlane.f32.xlu0 %v1504
    %v1506 = vpop.xlane.xlu0 %1505
    %v1507 = vmul.f32 %v1503, %v101
    %v1508 = vmul.f32 %v1506, %v101
    %v1509 = vadd.f32 %v1507, 1e-06
    %v1510 = vadd.f32 %v1508, 1e-06
    %v1511 = vrsqrt.pop %v1509
    %v1512 = vmul.f32 %v1511, %v1509
    %v1513 = vmul.f32 %v1512, %v1511
    %v1514 = vmul.f32 0.5, %v1513
    %v1515 = vsub.f32 1.5, %v1514
    %v1516 = vmul.f32 %v1511, %v1515
    %vm1517 = vweird.f32 %v1509
    %vm1518 = vweird.f32 %v1511
    %vm1519 = vmor %vm1517, %vm1518
    %v1520 = vsel %vm1519, %v1511, %v1516
    %v1521 = vrsqrt.pop %v1510
    %v1522 = vmul.f32 %v1521, %v1510
    %v1523 = vmul.f32 %v1522, %v1521
    %v1524 = vmul.f32 0.5, %v1523
    %v1525 = vsub.f32 1.5, %v1524
    %v1526 = vmul.f32 %v1521, %v1525
    %vm1527 = vweird.f32 %v1510
    %vm1528 = vweird.f32 %v1521
    %vm1529 = vmor %vm1527, %vm1528
    %v1530 = vsel %vm1529, %v1521, %v1526
    %v1531 = vmul.f32 %v1497, %v1520
    %v1532 = vmul.f32 %v1498, %v1530
    %v1533 = vperm.slane %v43, 6
    %v1534 = vmul.f32 %v1531, %v1533
    %v1535 = vmul.f32 %v1532, %v1533
    %v1536 = vperm.slane %v43, 7
    %v1537 = vadd.f32 %v1534, %v1536
    %v1538 = vadd.f32 %v1535, %v1536
    %1539 = vst.msk [vmem:[#allocation2] sm:$0xff] %vm88, %v1537
    %1540 = vst.msk [vmem:[#allocation2 + $0x8] sm:$0xff] %vm88, %v1538
    // Predicated region
    $region34: #{transformer_encoder.1} parent=1 // pred_check
      _
    $region35: #{transformer_encoder.1} parent=1 // pred_check_branch
      %1542 = sbr.rel (0) target = $region37
    $region36: #{transformer_encoder.1} parent=1 // pred_region
      %1544 = vsyncadd [#allocation3], 0
      %s1545 = sshll.u32 [#allocation2], 4
      %s1546 = int_to_ptr.vmem [resolvable:$true] %s1545
      %s1547 = sshll.u32 %s8, 4
      %s1548 = int_to_ptr.hbm [resolvable:$true] %s1547
      %1553 = dma.vmem_to_hbm [thread:$0]  %s1546, 256, %s1548, [#allocation3], 128, 128, 8
    $region37: #{transformer_encoder.1} parent=1 // pred_fallthru
      _
    // Predicated region
    $region38: #{transformer_encoder.1} parent=1 // pred_check
      _
    $region39: #{transformer_encoder.1} parent=1 // pred_check_branch
      %1555 = sbr.rel (0) target = $region41
    $region40: #{transformer_encoder.1} parent=1 // pred_region
      %1557 = dma.done [#allocation3], 256
    $region41: #{transformer_encoder.1} parent=1 // pred_fallthru
      _
    %1558 = vsyncpa [#allocation3], 1

</llo_original>
